<compile_context>
chip_gen: v6e
topology: v6e:2x2x1
jax: 0.10.0
libtpu: 0.0.40
codegen_flags: <defaults>
</compile_context>

<pallas_src>
import functools

import numpy as np
import jax
import jax.numpy as jnp
from jax import lax
from jax.experimental import pallas as pl
from jax.experimental.pallas import tpu as pltpu


# ----------------------------------------------------------------------------
# Kernel: one batch element per grid step (batch dim squeezed out of the block).
# ----------------------------------------------------------------------------
def deepseek_block_kernel(
    x_ref, rms1_ref, rms2_ref,
    wqkv_ref, bqkv_ref, wo_ref, bo_ref,
    w12_ref, b12_ref, w3_ref, b3_ref,
    cos_ref, sin_ref,
    o_ref,
    *, num_heads, num_query_groups, d_ff, is_causal, eps):
  S, D = x_ref.shape
  H = num_heads
  G = num_query_groups
  hd = D // H
  hpg = H // G
  nq = G * hd
  scale = float(hd) ** -0.5
  bf16 = jnp.bfloat16

  x = x_ref[...].astype(jnp.float32)                            # (S, D)

  # ---- RMSNorm 1 (f32) -----------------------------------------------------
  rms1 = lax.rsqrt(jnp.mean(x * x, axis=-1, keepdims=True) + eps)
  h = rms1_ref[...] * x * rms1                                   # (S, D)

  # ---- fused QKV projection (bf16 MXU, f32 accumulation) --------------------
  qkv = jnp.dot(h.astype(bf16), wqkv_ref[...],
                preferred_element_type=jnp.float32) + bqkv_ref[...]
  q = qkv[:, :nq].reshape(S, G, hd)                              # (S, G, hd)
  k = qkv[:, nq:nq + D].reshape(S, H, hd)                        # (S, H, hd)
  v = qkv[:, nq + D:].reshape(S, H, hd)                          # (S, H, hd)

  # ---- rotary position embedding (f32, q BEFORE head expansion) -------------
  cos = cos_ref[...][:, None, :]                                 # (S, 1, hd)
  sin = sin_ref[...][:, None, :]

  def rotate_half(t):
    t1 = t[..., : hd // 2]
    t2 = t[..., hd // 2:]
    return jnp.concatenate([-t2, t1], axis=-1)

  q = q * cos + rotate_half(q) * sin                             # (S, G, hd)
  k = k * cos + rotate_half(k) * sin                             # (S, H, hd)

  # expand groups -> heads (group-major == torch.repeat_interleave(dim=2))
  q = jnp.broadcast_to(q[:, :, None, :], (S, G, hpg, hd)).reshape(S, H, hd)

  # ---- attention (bf16 matmuls, f32 softmax stats) ---------------------------
  qh = jnp.transpose(q * scale, (1, 0, 2)).astype(bf16)          # (H, S, hd)
  kh = jnp.transpose(k, (1, 0, 2)).astype(bf16)
  vh = jnp.transpose(v, (1, 0, 2)).astype(bf16)

  scores = jnp.einsum('hqd,hkd->hqk', qh, kh,
                      preferred_element_type=jnp.float32)        # (H, S, S) f32
  if is_causal:
    row = lax.broadcasted_iota(jnp.int32, (S, S), 0)
    col = lax.broadcasted_iota(jnp.int32, (S, S), 1)
    scores = jnp.where((row >= col)[None, :, :], scores, -1e10)

  m = jnp.max(scores, axis=-1, keepdims=True)
  e = jnp.exp(scores - m)                                        # f32
  l = jnp.sum(e, axis=-1, keepdims=True)                         # (H, S, 1) f32

  ctx = jnp.einsum('hqk,hkd->hqd', e.astype(bf16), vh,
                   preferred_element_type=jnp.float32)           # (H, S, hd)
  ctx = ctx * pl.reciprocal(l, approx=True)                      # normalize post-PV
  ctx = jnp.transpose(ctx, (1, 0, 2)).reshape(S, D)

  attn_out = jnp.dot(ctx.astype(bf16), wo_ref[...],
                     preferred_element_type=jnp.float32) + bo_ref[...]
  x1 = x + attn_out                                              # residual (dropout=id)

  # ---- RMSNorm 2 + SwiGLU (fused gate/up) ------------------------------------
  rms2 = lax.rsqrt(jnp.mean(x1 * x1, axis=-1, keepdims=True) + eps)
  h2 = (rms2_ref[...] * x1 * rms2).astype(bf16)
  gu = jnp.dot(h2, w12_ref[...],
               preferred_element_type=jnp.float32) + b12_ref[...]  # (S, 2*DFF)
  a = gu[:, :d_ff]
  g = gu[:, d_ff:]
  swish = a * jax.nn.sigmoid(g)                                  # f32 elementwise
  ff = jnp.dot(swish.astype(bf16), w3_ref[...],
               preferred_element_type=jnp.float32) + b3_ref[...]
  o_ref[...] = (x1 + ff).astype(o_ref.dtype)


# ----------------------------------------------------------------------------
# Wrapper: rotary table + weight fusion / bf16 cast, then pallas_call with a
# batch grid. Weights use constant index maps so they stay resident in VMEM.
# ----------------------------------------------------------------------------
def deepseek_block(x, params, *, num_heads, num_query_groups,
                   is_causal=False, eps=1e-6):
  B, S, D = x.shape
  hd = D // num_heads
  d_ff = params['w1'].shape[1]
  bf16 = jnp.bfloat16

  inv_freq = 1.0 / (10000.0 ** (jnp.arange(0, hd, 2, dtype=jnp.float32) / hd))
  pos = jnp.arange(S, dtype=jnp.float32)
  freqs = jnp.outer(pos, inv_freq)
  emb = jnp.concatenate([freqs, freqs], axis=-1)
  cos, sin = jnp.cos(emb), jnp.sin(emb)                          # (S, hd) f32

  wqkv = jnp.concatenate([params['wq'], params['wk'], params['wv']], axis=1).astype(bf16)
  bqkv = jnp.concatenate([params['bq'], params['bk'], params['bv']]).reshape(1, -1)
  w12 = jnp.concatenate([params['w1'], params['w2']], axis=1).astype(bf16)
  b12 = jnp.concatenate([params['b1'], params['b2']]).reshape(1, -1)
  wo = params['wo'].astype(bf16)
  bo = params['bo'].reshape(1, -1)
  w3 = params['w3'].astype(bf16)
  b3 = params['b3'].reshape(1, -1)
  rms1 = params['rms1'].reshape(1, D).astype(jnp.float32)
  rms2 = params['rms2'].reshape(1, D).astype(jnp.float32)

  args = (x, rms1, rms2, wqkv, bqkv, wo, bo, w12, b12, w3, b3, cos, sin)

  # x is tiled per batch element; everything else is a 2-D constant block that
  # is fetched once and stays resident across grid steps.
  x_spec = pl.BlockSpec((None, S, D), lambda b: (b, 0, 0))
  const_specs = [pl.BlockSpec(a.shape, lambda b: (0, 0)) for a in args[1:]]

  kernel = functools.partial(
      deepseek_block_kernel,
      num_heads=num_heads, num_query_groups=num_query_groups,
      d_ff=d_ff, is_causal=is_causal, eps=eps)

  return pl.pallas_call(
      kernel,
      out_shape=jax.ShapeDtypeStruct((B, S, D), x.dtype),
      grid=(B,),
      in_specs=[x_spec] + const_specs,
      out_specs=pl.BlockSpec((None, S, D), lambda b: (b, 0, 0)),
      compiler_params=pltpu.CompilerParams(
          dimension_semantics=("parallel",)),
  )(*args)


# ----------------------------------------------------------------------------
# Pure-JAX f32 reference (mirrors the PyTorch forward) for correctness check.
# ----------------------------------------------------------------------------
def reference_block(x, params, *, num_heads, num_query_groups,
                    is_causal=False, eps=1e-6):
  B, S, D = x.shape
  H, G = num_heads, num_query_groups
  hd, hpg = D // H, H // G
  scale = hd ** -0.5

  inv_freq = 1.0 / (10000.0 ** (jnp.arange(0, hd, 2, dtype=jnp.float32) / hd))
  emb = jnp.concatenate([jnp.outer(jnp.arange(S, dtype=jnp.float32), inv_freq)] * 2, -1)
  cos, sin = jnp.cos(emb)[None, :, None, :], jnp.sin(emb)[None, :, None, :]

  def rmsnorm(t, w):
    return w * t * lax.rsqrt(jnp.mean(t * t, -1, keepdims=True) + eps)

  def rot_half(t):
    t1, t2 = t[..., :hd // 2], t[..., hd // 2:]
    return jnp.concatenate([-t2, t1], -1)

  h = rmsnorm(x, params['rms1'])
  q = (h @ params['wq'] + params['bq']).reshape(B, S, G, hd)
  k = (h @ params['wk'] + params['bk']).reshape(B, S, H, hd)
  v = (h @ params['wv'] + params['bv']).reshape(B, S, H, hd)
  q = jnp.repeat(q, hpg, axis=2)
  q = q * cos + rot_half(q) * sin
  k = k * cos + rot_half(k) * sin
  qh, kh, vh = (jnp.transpose(t, (0, 2, 1, 3)) for t in (q, k, v))
  scores = jnp.einsum('bhqd,bhkd->bhqk', qh, kh) * scale
  if is_causal:
    causal = jnp.tril(jnp.ones((S, S)))
    scores = jnp.where(causal[None, None] == 0, -1e10, scores)
  attn = jax.nn.softmax(scores, axis=-1)
  ctx = jnp.einsum('bhqk,bhkd->bhqd', attn, vh)
  ctx = jnp.transpose(ctx, (0, 2, 1, 3)).reshape(B, S, D)
  x1 = x + (ctx @ params['wo'] + params['bo'])
  h2 = rmsnorm(x1, params['rms2'])
  swish = (h2 @ params['w1'] + params['b1']) * jax.nn.sigmoid(h2 @ params['w2'] + params['b2'])
  return x1 + (swish @ params['w3'] + params['b3'])


if __name__ == "__main__":
  B, S, D, H, G, DFF = 2, 8, 32, 4, 2, 64
  hd = D // H

  key = jax.random.PRNGKey(0)
  keys = jax.random.split(key, 16)

  def w(k, shape, scale=0.05):
    return scale * jax.random.normal(k, shape, dtype=jnp.float32)

  params = {
      'rms1': jnp.ones((D,), jnp.float32),
      'rms2': jnp.ones((D,), jnp.float32),
      'wq': w(keys[0], (D, hd * G)), 'bq': w(keys[1], (hd * G,)),
      'wk': w(keys[2], (D, D)),      'bk': w(keys[3], (D,)),
      'wv': w(keys[4], (D, D)),      'bv': w(keys[5], (D,)),
      'wo': w(keys[6], (D, D)),      'bo': w(keys[7], (D,)),
      'w1': w(keys[8], (D, DFF)),    'b1': w(keys[9], (DFF,)),
      'w2': w(keys[10], (D, DFF)),   'b2': w(keys[11], (DFF,)),
      'w3': w(keys[12], (DFF, D)),   'b3': w(keys[13], (D,)),
  }
  x = jax.random.normal(keys[14], (B, S, D), dtype=jnp.float32)

  out = deepseek_block(x, params, num_heads=H, num_query_groups=G, is_causal=True)
  out = jax.block_until_ready(out)

  ref = reference_block(x, params, num_heads=H, num_query_groups=G, is_causal=True)
  assert out.shape == (B, S, D)
  # bf16 matmul operands + approx reciprocal -> loosened tolerance vs f32 reference
  assert np.allclose(np.asarray(out), np.asarray(ref), rtol=2e-2, atol=2e-2), \
      "Pallas kernel output mismatch vs JAX reference"

  print("KERNEL_OK")
</pallas_src>

<mosaic_0001>
module attributes {stable_mosaic.version = 11 : i64} {
  func.func @deepseek_block_kernel(%arg0: i32, %arg1: memref<1x8x32xf32, #tpu.memory_space<vmem>>, %arg2: memref<1x32xf32, #tpu.memory_space<vmem>>, %arg3: memref<1x32xf32, #tpu.memory_space<vmem>>, %arg4: memref<32x80xbf16, #tpu.memory_space<vmem>>, %arg5: memref<1x80xf32, #tpu.memory_space<vmem>>, %arg6: memref<32x32xbf16, #tpu.memory_space<vmem>>, %arg7: memref<1x32xf32, #tpu.memory_space<vmem>>, %arg8: memref<32x128xbf16, #tpu.memory_space<vmem>>, %arg9: memref<1x128xf32, #tpu.memory_space<vmem>>, %arg10: memref<64x32xbf16, #tpu.memory_space<vmem>>, %arg11: memref<1x32xf32, #tpu.memory_space<vmem>>, %arg12: memref<8x8xf32, #tpu.memory_space<vmem>>, %arg13: memref<8x8xf32, #tpu.memory_space<vmem>>, %arg14: memref<1x8x32xf32, #tpu.memory_space<vmem>>) attributes {dimension_semantics = [#tpu.dimension_semantics<parallel>], iteration_bounds = array<i64: 2>, scalar_prefetch = 0 : i64, scratch_operands = 0 : i64, tpu.core_type = #tpu.core_type<tc>, window_params = [{transform_indices = @transform_0, window_bounds = array<i64: 1, 8, 32>}, {pipeline_mode = #tpu.pipeline_mode<synchronous>, transform_indices = @transform_1, window_bounds = array<i64: 1, 32>}, {pipeline_mode = #tpu.pipeline_mode<synchronous>, transform_indices = @transform_2, window_bounds = array<i64: 1, 32>}, {pipeline_mode = #tpu.pipeline_mode<synchronous>, transform_indices = @transform_3, window_bounds = array<i64: 32, 80>}, {pipeline_mode = #tpu.pipeline_mode<synchronous>, transform_indices = @transform_4, window_bounds = array<i64: 1, 80>}, {pipeline_mode = #tpu.pipeline_mode<synchronous>, transform_indices = @transform_5, window_bounds = array<i64: 32, 32>}, {pipeline_mode = #tpu.pipeline_mode<synchronous>, transform_indices = @transform_6, window_bounds = array<i64: 1, 32>}, {pipeline_mode = #tpu.pipeline_mode<synchronous>, transform_indices = @transform_7, window_bounds = array<i64: 32, 128>}, {pipeline_mode = #tpu.pipeline_mode<synchronous>, transform_indices = @transform_8, window_bounds = array<i64: 1, 128>}, {pipeline_mode = #tpu.pipeline_mode<synchronous>, transform_indices = @transform_9, window_bounds = array<i64: 64, 32>}, {pipeline_mode = #tpu.pipeline_mode<synchronous>, transform_indices = @transform_10, window_bounds = array<i64: 1, 32>}, {pipeline_mode = #tpu.pipeline_mode<synchronous>, transform_indices = @transform_11, window_bounds = array<i64: 8, 8>}, {pipeline_mode = #tpu.pipeline_mode<synchronous>, transform_indices = @transform_12, window_bounds = array<i64: 8, 8>}, {transform_indices = @transform_13, window_bounds = array<i64: 1, 8, 32>}]} {
    %c0 = arith.constant 0 : index
    %c0_0 = arith.constant 0 : index
    %c0_1 = arith.constant 0 : index
    %0 = vector.load %arg1[%c0, %c0_0, %c0_1] : memref<1x8x32xf32, #tpu.memory_space<vmem>>, vector<1x8x32xf32>
    %1 = vector.shape_cast %0 : vector<1x8x32xf32> to vector<8x32xf32>
    %2 = arith.mulf %1, %1 : vector<8x32xf32>
    %cst = arith.constant dense<0.000000e+00> : vector<8xf32>
    %3 = vector.multi_reduction <add>, %2, %cst [1] : vector<8x32xf32> to vector<8xf32>
    %4 = vector.shape_cast %3 : vector<8xf32> to vector<8x1xf32>
    %cst_2 = arith.constant 3.200000e+01 : f32
    %5 = vector.broadcast %cst_2 : f32 to vector<8x1xf32>
    %6 = arith.divf %4, %5 : vector<8x1xf32>
    %cst_3 = arith.constant 9.99999997E-7 : f32
    %7 = vector.broadcast %cst_3 : f32 to vector<8x1xf32>
    %8 = arith.addf %6, %7 : vector<8x1xf32>
    %9 = math.rsqrt %8 : vector<8x1xf32>
    %c0_4 = arith.constant 0 : index
    %c0_5 = arith.constant 0 : index
    %10 = vector.load %arg2[%c0_4, %c0_5] : memref<1x32xf32, #tpu.memory_space<vmem>>, vector<1x32xf32>
    %11 = vector.broadcast %10 : vector<1x32xf32> to vector<8x32xf32>
    %12 = arith.mulf %11, %1 : vector<8x32xf32>
    %13 = vector.broadcast %9 : vector<8x1xf32> to vector<8x32xf32>
    %14 = arith.mulf %12, %13 : vector<8x32xf32>
    %15 = arith.truncf %14 : vector<8x32xf32> to vector<8x32xbf16>
    %c0_6 = arith.constant 0 : index
    %c0_7 = arith.constant 0 : index
    %16 = vector.load %arg4[%c0_6, %c0_7] : memref<32x80xbf16, #tpu.memory_space<vmem>>, vector<32x80xbf16>
    %cst_8 = arith.constant dense<0.000000e+00> : vector<8x80xf32>
    %17 = tpu.matmul %15, %16, %cst_8 {dimension_numbers = #tpu.dot_dimension_numbers<[1], [0], [0], [1], [0, 0, 1, 1], [], []>} : vector<8x32xbf16>, vector<32x80xbf16>, vector<8x80xf32> -> vector<8x80xf32>
    %c0_9 = arith.constant 0 : index
    %c0_10 = arith.constant 0 : index
    %18 = vector.load %arg5[%c0_9, %c0_10] : memref<1x80xf32, #tpu.memory_space<vmem>>, vector<1x80xf32>
    %19 = vector.broadcast %18 : vector<1x80xf32> to vector<8x80xf32>
    %20 = arith.addf %17, %19 : vector<8x80xf32>
    %21 = vector.extract_strided_slice %20 {offsets = [0, 0], sizes = [8, 16], strides = [1, 1]} : vector<8x80xf32> to vector<8x16xf32>
    %22 = vector.shape_cast %21 : vector<8x16xf32> to vector<8x2x8xf32>
    %23 = vector.extract_strided_slice %20 {offsets = [0, 16], sizes = [8, 32], strides = [1, 1]} : vector<8x80xf32> to vector<8x32xf32>
    %24 = vector.shape_cast %23 : vector<8x32xf32> to vector<8x4x8xf32>
    %25 = vector.extract_strided_slice %20 {offsets = [0, 48], sizes = [8, 32], strides = [1, 1]} : vector<8x80xf32> to vector<8x32xf32>
    %26 = vector.shape_cast %25 : vector<8x32xf32> to vector<8x4x8xf32>
    %c0_11 = arith.constant 0 : index
    %c0_12 = arith.constant 0 : index
    %27 = vector.load %arg12[%c0_11, %c0_12] : memref<8x8xf32, #tpu.memory_space<vmem>>, vector<8x8xf32>
    %28 = vector.shape_cast %27 : vector<8x8xf32> to vector<8x1x8xf32>
    %c0_13 = arith.constant 0 : index
    %c0_14 = arith.constant 0 : index
    %29 = vector.load %arg13[%c0_13, %c0_14] : memref<8x8xf32, #tpu.memory_space<vmem>>, vector<8x8xf32>
    %30 = vector.shape_cast %29 : vector<8x8xf32> to vector<8x1x8xf32>
    %31 = vector.broadcast %28 : vector<8x1x8xf32> to vector<8x2x8xf32>
    %32 = arith.mulf %22, %31 : vector<8x2x8xf32>
    %33 = vector.extract_strided_slice %22 {offsets = [0, 0, 0], sizes = [8, 2, 4], strides = [1, 1, 1]} : vector<8x2x8xf32> to vector<8x2x4xf32>
    %34 = vector.extract_strided_slice %22 {offsets = [0, 0, 4], sizes = [8, 2, 4], strides = [1, 1, 1]} : vector<8x2x8xf32> to vector<8x2x4xf32>
    %cst_15 = arith.constant 0.000000e+00 : f32
    %35 = vector.broadcast %cst_15 : f32 to vector<8x2x4xf32>
    %36 = arith.subf %35, %34 : vector<8x2x4xf32>
    %37 = tpu.concatenate %36, %33 in 2 : vector<8x2x4xf32>, vector<8x2x4xf32> -> vector<8x2x8xf32>
    %38 = vector.broadcast %30 : vector<8x1x8xf32> to vector<8x2x8xf32>
    %39 = arith.mulf %37, %38 : vector<8x2x8xf32>
    %40 = arith.addf %32, %39 : vector<8x2x8xf32>
    %41 = vector.broadcast %28 : vector<8x1x8xf32> to vector<8x4x8xf32>
    %42 = arith.mulf %24, %41 : vector<8x4x8xf32>
    %43 = vector.extract_strided_slice %24 {offsets = [0, 0, 0], sizes = [8, 4, 4], strides = [1, 1, 1]} : vector<8x4x8xf32> to vector<8x4x4xf32>
    %44 = vector.extract_strided_slice %24 {offsets = [0, 0, 4], sizes = [8, 4, 4], strides = [1, 1, 1]} : vector<8x4x8xf32> to vector<8x4x4xf32>
    %cst_16 = arith.constant 0.000000e+00 : f32
    %45 = vector.broadcast %cst_16 : f32 to vector<8x4x4xf32>
    %46 = arith.subf %45, %44 : vector<8x4x4xf32>
    %47 = tpu.concatenate %46, %43 in 2 : vector<8x4x4xf32>, vector<8x4x4xf32> -> vector<8x4x8xf32>
    %48 = vector.broadcast %30 : vector<8x1x8xf32> to vector<8x4x8xf32>
    %49 = arith.mulf %47, %48 : vector<8x4x8xf32>
    %50 = arith.addf %42, %49 : vector<8x4x8xf32>
    %51 = vector.shape_cast %40 : vector<8x2x8xf32> to vector<8x2x1x8xf32>
    %52 = vector.shape_cast %51 : vector<8x2x1x8xf32> to vector<8x2x1x8xf32>
    %53 = vector.broadcast %52 : vector<8x2x1x8xf32> to vector<8x2x2x8xf32>
    %54 = vector.shape_cast %53 : vector<8x2x2x8xf32> to vector<8x4x8xf32>
    %cst_17 = arith.constant 0.353553385 : f32
    %55 = vector.broadcast %cst_17 : f32 to vector<8x4x8xf32>
    %56 = arith.mulf %54, %55 : vector<8x4x8xf32>
    %57 = tpu.transpose %56, [1, 0, 2] : vector<8x4x8xf32> -> vector<4x8x8xf32>
    %58 = arith.truncf %57 : vector<4x8x8xf32> to vector<4x8x8xbf16>
    %59 = tpu.transpose %50, [1, 0, 2] : vector<8x4x8xf32> -> vector<4x8x8xf32>
    %60 = arith.truncf %59 : vector<4x8x8xf32> to vector<4x8x8xbf16>
    %61 = tpu.transpose %26, [1, 0, 2] : vector<8x4x8xf32> -> vector<4x8x8xf32>
    %62 = arith.truncf %61 : vector<4x8x8xf32> to vector<4x8x8xbf16>
    "tpu.trace_start"() <{level = 10 : i32, message = "hqd,hkd->hqk"}> : () -> ()
    %cst_18 = arith.constant dense<0.000000e+00> : vector<4x8x8xf32>
    %63 = tpu.matmul %58, %60, %cst_18 {dimension_numbers = #tpu.dot_dimension_numbers<[2], [2], [1], [1], [0, 0, 0, 1, 1, 1], [0], [0]>} : vector<4x8x8xbf16>, vector<4x8x8xbf16>, vector<4x8x8xf32> -> vector<4x8x8xf32>
    "tpu.trace_stop"() : () -> ()
    %64 = tpu.iota {dimensions = array<i32: 0>} : vector<8x8xi32>
    %65 = tpu.iota {dimensions = array<i32: 1>} : vector<8x8xi32>
    %66 = arith.cmpi sge, %64, %65 : vector<8x8xi32>
    %67 = vector.shape_cast %66 : vector<8x8xi1> to vector<1x8x8xi1>
    %cst_19 = arith.constant -1.000000e+10 : f32
    %68 = vector.shape_cast %67 : vector<1x8x8xi1> to vector<1x8x8xi1>
    %69 = vector.broadcast %68 : vector<1x8x8xi1> to vector<4x8x8xi1>
    %70 = vector.broadcast %cst_19 : f32 to vector<4x8x8xf32>
    %71 = arith.select %69, %63, %70 : vector<4x8x8xi1>, vector<4x8x8xf32>
    %cst_20 = arith.constant dense<0xFF800000> : vector<4x8xf32>
    %72 = vector.multi_reduction <maximumf>, %71, %cst_20 [2] : vector<4x8x8xf32> to vector<4x8xf32>
    %73 = vector.shape_cast %72 : vector<4x8xf32> to vector<4x8x1xf32>
    %74 = vector.broadcast %73 : vector<4x8x1xf32> to vector<4x8x8xf32>
    %75 = arith.subf %71, %74 : vector<4x8x8xf32>
    %76 = math.exp %75 : vector<4x8x8xf32>
    %cst_21 = arith.constant dense<0.000000e+00> : vector<4x8xf32>
    %77 = vector.multi_reduction <add>, %76, %cst_21 [2] : vector<4x8x8xf32> to vector<4x8xf32>
    %78 = vector.shape_cast %77 : vector<4x8xf32> to vector<4x8x1xf32>
    %79 = arith.truncf %76 : vector<4x8x8xf32> to vector<4x8x8xbf16>
    "tpu.trace_start"() <{level = 10 : i32, message = "hqk,hkd->hqd"}> : () -> ()
    %cst_22 = arith.constant dense<0.000000e+00> : vector<4x8x8xf32>
    %80 = tpu.matmul %79, %62, %cst_22 {dimension_numbers = #tpu.dot_dimension_numbers<[2], [1], [1], [2], [0, 0, 0, 1, 1, 2], [0], [0]>} : vector<4x8x8xbf16>, vector<4x8x8xbf16>, vector<4x8x8xf32> -> vector<4x8x8xf32>
    "tpu.trace_stop"() : () -> ()
    %81 = tpu.reciprocal %78 {approx = true} : vector<4x8x1xf32> -> vector<4x8x1xf32>
    %82 = vector.broadcast %81 : vector<4x8x1xf32> to vector<4x8x8xf32>
    %83 = arith.mulf %80, %82 : vector<4x8x8xf32>
    %84 = tpu.transpose %83, [1, 0, 2] : vector<4x8x8xf32> -> vector<8x4x8xf32>
    %85 = vector.shape_cast %84 : vector<8x4x8xf32> to vector<8x32xf32>
    %86 = arith.truncf %85 : vector<8x32xf32> to vector<8x32xbf16>
    %c0_23 = arith.constant 0 : index
    %c0_24 = arith.constant 0 : index
    %87 = vector.load %arg6[%c0_23, %c0_24] : memref<32x32xbf16, #tpu.memory_space<vmem>>, vector<32x32xbf16>
    %cst_25 = arith.constant dense<0.000000e+00> : vector<8x32xf32>
    %88 = tpu.matmul %86, %87, %cst_25 {dimension_numbers = #tpu.dot_dimension_numbers<[1], [0], [0], [1], [0, 0, 1, 1], [], []>} : vector<8x32xbf16>, vector<32x32xbf16>, vector<8x32xf32> -> vector<8x32xf32>
    %c0_26 = arith.constant 0 : index
    %c0_27 = arith.constant 0 : index
    %89 = vector.load %arg7[%c0_26, %c0_27] : memref<1x32xf32, #tpu.memory_space<vmem>>, vector<1x32xf32>
    %90 = vector.broadcast %89 : vector<1x32xf32> to vector<8x32xf32>
    %91 = arith.addf %88, %90 : vector<8x32xf32>
    %92 = arith.addf %1, %91 : vector<8x32xf32>
    %93 = arith.mulf %92, %92 : vector<8x32xf32>
    %cst_28 = arith.constant dense<0.000000e+00> : vector<8xf32>
    %94 = vector.multi_reduction <add>, %93, %cst_28 [1] : vector<8x32xf32> to vector<8xf32>
    %95 = vector.shape_cast %94 : vector<8xf32> to vector<8x1xf32>
    %cst_29 = arith.constant 3.200000e+01 : f32
    %96 = vector.broadcast %cst_29 : f32 to vector<8x1xf32>
    %97 = arith.divf %95, %96 : vector<8x1xf32>
    %cst_30 = arith.constant 9.99999997E-7 : f32
    %98 = vector.broadcast %cst_30 : f32 to vector<8x1xf32>
    %99 = arith.addf %97, %98 : vector<8x1xf32>
    %100 = math.rsqrt %99 : vector<8x1xf32>
    %c0_31 = arith.constant 0 : index
    %c0_32 = arith.constant 0 : index
    %101 = vector.load %arg3[%c0_31, %c0_32] : memref<1x32xf32, #tpu.memory_space<vmem>>, vector<1x32xf32>
    %102 = vector.broadcast %101 : vector<1x32xf32> to vector<8x32xf32>
    %103 = arith.mulf %102, %92 : vector<8x32xf32>
    %104 = vector.broadcast %100 : vector<8x1xf32> to vector<8x32xf32>
    %105 = arith.mulf %103, %104 : vector<8x32xf32>
    %106 = arith.truncf %105 : vector<8x32xf32> to vector<8x32xbf16>
    %c0_33 = arith.constant 0 : index
    %c0_34 = arith.constant 0 : index
    %107 = vector.load %arg8[%c0_33, %c0_34] : memref<32x128xbf16, #tpu.memory_space<vmem>>, vector<32x128xbf16>
    %cst_35 = arith.constant dense<0.000000e+00> : vector<8x128xf32>
    %108 = tpu.matmul %106, %107, %cst_35 {dimension_numbers = #tpu.dot_dimension_numbers<[1], [0], [0], [1], [0, 0, 1, 1], [], []>} : vector<8x32xbf16>, vector<32x128xbf16>, vector<8x128xf32> -> vector<8x128xf32>
    %c0_36 = arith.constant 0 : index
    %c0_37 = arith.constant 0 : index
    %109 = vector.load %arg9[%c0_36, %c0_37] : memref<1x128xf32, #tpu.memory_space<vmem>>, vector<1x128xf32>
    %110 = vector.broadcast %109 : vector<1x128xf32> to vector<8x128xf32>
    %111 = arith.addf %108, %110 : vector<8x128xf32>
    %112 = vector.extract_strided_slice %111 {offsets = [0, 0], sizes = [8, 64], strides = [1, 1]} : vector<8x128xf32> to vector<8x64xf32>
    %113 = vector.extract_strided_slice %111 {offsets = [0, 64], sizes = [8, 64], strides = [1, 1]} : vector<8x128xf32> to vector<8x64xf32>
    %114 = arith.negf %113 : vector<8x64xf32>
    %115 = math.exp %114 : vector<8x64xf32>
    %cst_38 = arith.constant 1.000000e+00 : f32
    %116 = vector.broadcast %cst_38 : f32 to vector<8x64xf32>
    %117 = arith.addf %116, %115 : vector<8x64xf32>
    %118 = arith.divf %116, %117 : vector<8x64xf32>
    %119 = arith.mulf %112, %118 : vector<8x64xf32>
    %120 = arith.truncf %119 : vector<8x64xf32> to vector<8x64xbf16>
    %c0_39 = arith.constant 0 : index
    %c0_40 = arith.constant 0 : index
    %121 = vector.load %arg10[%c0_39, %c0_40] : memref<64x32xbf16, #tpu.memory_space<vmem>>, vector<64x32xbf16>
    %cst_41 = arith.constant dense<0.000000e+00> : vector<8x32xf32>
    %122 = tpu.matmul %120, %121, %cst_41 {dimension_numbers = #tpu.dot_dimension_numbers<[1], [0], [0], [1], [0, 0, 1, 1], [], []>} : vector<8x64xbf16>, vector<64x32xbf16>, vector<8x32xf32> -> vector<8x32xf32>
    %c0_42 = arith.constant 0 : index
    %c0_43 = arith.constant 0 : index
    %123 = vector.load %arg11[%c0_42, %c0_43] : memref<1x32xf32, #tpu.memory_space<vmem>>, vector<1x32xf32>
    %124 = vector.broadcast %123 : vector<1x32xf32> to vector<8x32xf32>
    %125 = arith.addf %122, %124 : vector<8x32xf32>
    %126 = arith.addf %92, %125 : vector<8x32xf32>
    %c0_44 = arith.constant 0 : index
    %c0_45 = arith.constant 0 : index
    %c0_46 = arith.constant 0 : index
    %127 = vector.load %arg14[%c0_44, %c0_45, %c0_46] : memref<1x8x32xf32, #tpu.memory_space<vmem>>, vector<1x8x32xf32>
    %128 = vector.shape_cast %127 : vector<1x8x32xf32> to vector<8x32xf32>
    %129 = vector.shape_cast %126 : vector<8x32xf32> to vector<1x8x32xf32>
    tpu.vector_store %arg14[%c0_44, %c0_45, %c0_46], %129 {strides = array<i32>} : memref<1x8x32xf32, #tpu.memory_space<vmem>>, vector<1x8x32xf32>,
    return
  }
  func.func @transform_0(%arg0: i32) -> (i32, i32, i32) {
    %c0_i32 = arith.constant 0 : i32
    %c0_i32_0 = arith.constant 0 : i32
    %c0_i32_1 = arith.constant 0 : i32
    return %arg0, %c0_i32, %c0_i32_0 : i32, i32, i32
  }
  func.func @transform_1(%arg0: i32) -> (i32, i32) {
    %c0_i32 = arith.constant 0 : i32
    %c0_i32_0 = arith.constant 0 : i32
    %c0_i32_1 = arith.constant 0 : i32
    return %c0_i32, %c0_i32_0 : i32, i32
  }
  func.func @transform_2(%arg0: i32) -> (i32, i32) {
    %c0_i32 = arith.constant 0 : i32
    %c0_i32_0 = arith.constant 0 : i32
    %c0_i32_1 = arith.constant 0 : i32
    return %c0_i32, %c0_i32_0 : i32, i32
  }
  func.func @transform_3(%arg0: i32) -> (i32, i32) {
    %c0_i32 = arith.constant 0 : i32
    %c0_i32_0 = arith.constant 0 : i32
    %c0_i32_1 = arith.constant 0 : i32
    return %c0_i32, %c0_i32_0 : i32, i32
  }
  func.func @transform_4(%arg0: i32) -> (i32, i32) {
    %c0_i32 = arith.constant 0 : i32
    %c0_i32_0 = arith.constant 0 : i32
    %c0_i32_1 = arith.constant 0 : i32
    return %c0_i32, %c0_i32_0 : i32, i32
  }
  func.func @transform_5(%arg0: i32) -> (i32, i32) {
    %c0_i32 = arith.constant 0 : i32
    %c0_i32_0 = arith.constant 0 : i32
    %c0_i32_1 = arith.constant 0 : i32
    return %c0_i32, %c0_i32_0 : i32, i32
  }
  func.func @transform_6(%arg0: i32) -> (i32, i32) {
    %c0_i32 = arith.constant 0 : i32
    %c0_i32_0 = arith.constant 0 : i32
    %c0_i32_1 = arith.constant 0 : i32
    return %c0_i32, %c0_i32_0 : i32, i32
  }
  func.func @transform_7(%arg0: i32) -> (i32, i32) {
    %c0_i32 = arith.constant 0 : i32
    %c0_i32_0 = arith.constant 0 : i32
    %c0_i32_1 = arith.constant 0 : i32
    return %c0_i32, %c0_i32_0 : i32, i32
  }
  func.func @transform_8(%arg0: i32) -> (i32, i32) {
    %c0_i32 = arith.constant 0 : i32
    %c0_i32_0 = arith.constant 0 : i32
    %c0_i32_1 = arith.constant 0 : i32
    return %c0_i32, %c0_i32_0 : i32, i32
  }
  func.func @transform_9(%arg0: i32) -> (i32, i32) {
    %c0_i32 = arith.constant 0 : i32
    %c0_i32_0 = arith.constant 0 : i32
    %c0_i32_1 = arith.constant 0 : i32
    return %c0_i32, %c0_i32_0 : i32, i32
  }
  func.func @transform_10(%arg0: i32) -> (i32, i32) {
    %c0_i32 = arith.constant 0 : i32
    %c0_i32_0 = arith.constant 0 : i32
    %c0_i32_1 = arith.constant 0 : i32
    return %c0_i32, %c0_i32_0 : i32, i32
  }
  func.func @transform_11(%arg0: i32) -> (i32, i32) {
    %c0_i32 = arith.constant 0 : i32
    %c0_i32_0 = arith.constant 0 : i32
    %c0_i32_1 = arith.constant 0 : i32
    return %c0_i32, %c0_i32_0 : i32, i32
  }
  func.func @transform_12(%arg0: i32) -> (i32, i32) {
    %c0_i32 = arith.constant 0 : i32
    %c0_i32_0 = arith.constant 0 : i32
    %c0_i32_1 = arith.constant 0 : i32
    return %c0_i32, %c0_i32_0 : i32, i32
  }
  func.func @transform_13(%arg0: i32) -> (i32, i32, i32) {
    %c0_i32 = arith.constant 0 : i32
    %c0_i32_0 = arith.constant 0 : i32
    %c0_i32_1 = arith.constant 0 : i32
    return %arg0, %c0_i32, %c0_i32_0 : i32, i32, i32
  }
}

</mosaic_0001>

<llo_original>
// kernel: tpu_custom_call.1
$region0: #{tpu_custom_call.1}
  #allocation0 [shape = 'u32[]', space=smem, size = 0x4, offset = 0x4, fixed_abs, tag = 'smem constant byte address 0x4 - core index']
  #allocation1 [shape = 'u32[144,128]{1,0:T(1,128)}', space=vmem, size = 0x12000, scoped, tag = 'internal scratch']
  %s0 = inlined_call_operand.vmem [shape: f32[2,8,32], index: 0, kind: input, shape index: {}]
  %s1 = inlined_call_operand.hbm [shape: f32[1,32], index: 1, kind: input, shape index: {}]
  %s2 = inlined_call_operand.hbm [shape: f32[1,32], index: 2, kind: input, shape index: {}]
  %s3 = inlined_call_operand.vmem [shape: bf16[32,80], index: 3, kind: input, shape index: {}]
  %s4 = inlined_call_operand.hbm [shape: f32[1,80], index: 4, kind: input, shape index: {}]
  %s5 = inlined_call_operand.vmem [shape: bf16[32,32], index: 5, kind: input, shape index: {}]
  %s6 = inlined_call_operand.hbm [shape: f32[1,32], index: 6, kind: input, shape index: {}]
  %s7 = inlined_call_operand.hbm [shape: bf16[32,128], index: 7, kind: input, shape index: {}]
  %s8 = inlined_call_operand.hbm [shape: f32[1,128], index: 8, kind: input, shape index: {}]
  %s9 = inlined_call_operand.vmem [shape: bf16[64,32], index: 9, kind: input, shape index: {}]
  %s10 = inlined_call_operand.vmem [shape: f32[1,32], index: 10, kind: input, shape index: {}]
  %s11 = inlined_call_operand.hbm [shape: f32[8,8], index: 11, kind: input, shape index: {}]
  %s12 = inlined_call_operand.hbm [shape: f32[8,8], index: 12, kind: input, shape index: {}]
  %s13 = inlined_call_operand.hbm [shape: f32[2,8,32], index: 13, kind: output, shape index: {}]
  %s14 = sld [smem:[#allocation0]]
  $region117: #{tpu_custom_call.1} parent=0
    _
  %s16 = ssub.s32 1, %s14
  %s17 = scalar_select 0, %s16, %s14
  $region1: #{tpu_custom_call.1} parent=0
    #allocation2 [shape = 'u8[512]{0}', space=vmem, size = 0x400, scoped, tag = 'input window, operand 1, single buffered']
    #allocation3 [shape = 's32[2]{0}', space=sflag, size = 0x8, scoped, tag = 'scoped memory for tpu_custom_call.1']
    #allocation4 [shape = 's32[2]{0}', space=sflag, size = 0x8, scoped, tag = 'scoped memory for tpu_custom_call.1']
    #allocation5 [shape = 'u8[512]{0}', space=vmem, size = 0x400, scoped, tag = 'input window, operand 2, single buffered']
    #allocation6 [shape = 's32[1]{0}', space=sflag, size = 0x4, scoped, tag = 'scoped memory for tpu_custom_call.1']
    #allocation7 [shape = 'u8[512]{0}', space=vmem, size = 0x400, scoped, tag = 'input window, operand 4, single buffered']
    #allocation8 [shape = 'u8[512]{0}', space=vmem, size = 0x400, scoped, tag = 'input window, operand 6, single buffered']
    #allocation9 [shape = 's32[1]{0}', space=sflag, size = 0x4, scoped, tag = 'scoped memory for tpu_custom_call.1']
    #allocation10 [shape = 'u8[8192]{0}', space=vmem, size = 0x2000, scoped, tag = 'input window, operand 7, single buffered']
    #allocation11 [shape = 'u8[512]{0}', space=vmem, size = 0x400, scoped, tag = 'input window, operand 8, single buffered']
    #allocation12 [shape = 's32[1]{0}', space=sflag, size = 0x4, scoped, tag = 'scoped memory for tpu_custom_call.1']
    #allocation13 [shape = 'u8[4096]{0}', space=vmem, size = 0x1000, scoped, tag = 'input window, operand 11, single buffered']
    #allocation14 [shape = 'u8[4096]{0}', space=vmem, size = 0x1000, scoped, tag = 'input window, operand 12, single buffered']
    #allocation15 [shape = 's32[1]{0}', space=sflag, size = 0x4, scoped, tag = 'scoped memory for tpu_custom_call.1']
    #allocation16 [shape = 'u8[8192]{0}', space=vmem, size = 0x2000, scoped, tag = 'output window, operand 0']
    %18 = vsyncpa [#allocation3], 0
    %19 = vsyncpa [#allocation6], 0
    %20 = vsyncpa [#allocation9], 0
    %21 = vsyncpa [#allocation12], 0
    %22 = vsyncpa [#allocation15], 0
    %23 = vsyncpa [#allocation4], 0
    %s24 = scalar_lea.sflag [#allocation4], 1
    %25 = vsyncpa %s24, 0
    loop: start=0, step=1, limit=4
    $region2: #{tpu_custom_call.1} parent=1 // loop_pre_header
      _
    $region3: #{tpu_custom_call.1} parent=1 // loop_header
      %s27 = sphi 0, %s31
      %p28 = scmp.ge.s32.totalorder %s27, 4
      %s37 = sphi 0, %s39
      %s40 = sphi 0, %s37
      %s41 = sphi 0, %s40
      %s57 = sphi 0, %s41
      %s61 = sphi 0, %s61
      %s63 = sphi 0, %s61
      %s64 = sphi 0, %s63
      %s78 = sphi 0, %s64
      %s82 = sphi 0, %s82
      %s84 = sphi 0, %s82
      %s85 = sphi 0, %s84
      %s99 = sphi 0, %s85
      %s103 = sphi 0, %s103
      %s105 = sphi 0, %s103
      %s106 = sphi 0, %s105
      %s120 = sphi 0, %s106
      %s124 = sphi 0, %s124
      %s126 = sphi 0, %s124
      %s127 = sphi 0, %s126
      %s141 = sphi 0, %s127
      %s145 = sphi 0, %s145
      %s147 = sphi 0, %s145
      %s148 = sphi 0, %s147
      %s162 = sphi 0, %s148
      %s166 = sphi 0, %s166
      %s168 = sphi 0, %s166
      %s169 = sphi 0, %s168
      %s183 = sphi 0, %s169
      %s187 = sphi 0, %s187
      %s189 = sphi 0, %s187
      %s190 = sphi 0, %s189
      %s204 = sphi 0, %s190
      %s208 = sphi 0, %s208
      %s210 = sphi 0, %s208
      %s211 = sphi 0, %s210
      %s225 = sphi 0, %s211
      %s229 = sphi 0, %s229
      %s231 = sphi 0, %s229
      %s232 = sphi 0, %s231
      %s246 = sphi 0, %s232
      %s250 = sphi 0, %s250
      %s252 = sphi 0, %s250
      %s253 = sphi 0, %s252
      %s267 = sphi 0, %s253
      %s271 = sphi 0, %s271
      %s273 = sphi 0, %s271
      %s274 = sphi 0, %s273
      %s288 = sphi 0, %s274
      %s292 = sphi 0, %s292
      %s294 = sphi 0, %s292
      %s295 = sphi 0, %s294
      %s309 = sphi 0, %s295
      %s315 = sphi 0, %s317
      %s318 = sphi 0, %s315
      %s319 = sphi 0, %s318
      %s335 = sphi 0, %s319
    $region4: #{tpu_custom_call.1} parent=1 // loop_header_branch
      %30 = sbr.rel (%p28) target = $region8
    $region5: #{tpu_custom_call.1} parent=1 // loop_body
      %s32 = ssub.s32 %s27, 1
      %s33 = ssub.s32 %s27, 2
      %s34 = sadd.s32 %s27, 1
      %s35 = ssub.s32 %s27, %s34
      %p36 = scmp.eq.s32.totalorder %s35, 0
      %s38 = sadd.s32 %s37, 1
      %s39 = scalar_select %p36, %s37, %s38
      %p42 = pneg %p36
      %p43 = scmp.eq.s32.totalorder %s27, 1
      %p44 = por %p42, %p43
      %p45 = scmp.ne.s32.totalorder %s37, %s40
      %p46 = scmp.eq.s32.totalorder %s27, 0
      %p47 = por %p45, %p46
      %p48 = scmp.ne.s32.totalorder %s37, %s40
      %p49 = scmp.eq.s32.totalorder %s32, 1
      %p50 = por %p48, %p49
      %p51 = scmp.ne.s32.totalorder %s40, %s41
      %p52 = scmp.eq.s32.totalorder %s32, 0
      %p53 = por %p51, %p52
      %p54 = scmp.ne.s32.totalorder %s40, %s41
      %p55 = scmp.eq.s32.totalorder %s33, 1
      %p56 = por %p54, %p55
      %p58 = scmp.ne.s32.totalorder %s41, %s57
      %p59 = scmp.eq.s32.totalorder %s33, 0
      %p60 = por %p58, %p59
      %s62 = sadd.s32 %s61, 1
      %p65 = scmp.eq.s32.totalorder %s27, 1
      %p66 = scmp.ne.s32.totalorder %s61, %s63
      %p67 = scmp.eq.s32.totalorder %s27, 0
      %p68 = por %p66, %p67
      %p69 = scmp.ne.s32.totalorder %s61, %s63
      %p70 = scmp.eq.s32.totalorder %s32, 1
      %p71 = por %p69, %p70
      %p72 = scmp.ne.s32.totalorder %s63, %s64
      %p73 = scmp.eq.s32.totalorder %s32, 0
      %p74 = por %p72, %p73
      %p75 = scmp.ne.s32.totalorder %s63, %s64
      %p76 = scmp.eq.s32.totalorder %s33, 1
      %p77 = por %p75, %p76
      %p79 = scmp.ne.s32.totalorder %s64, %s78
      %p80 = scmp.eq.s32.totalorder %s33, 0
      %p81 = por %p79, %p80
      %s83 = sadd.s32 %s82, 1
      %p86 = scmp.eq.s32.totalorder %s27, 1
      %p87 = scmp.ne.s32.totalorder %s82, %s84
      %p88 = scmp.eq.s32.totalorder %s27, 0
      %p89 = por %p87, %p88
      %p90 = scmp.ne.s32.totalorder %s82, %s84
      %p91 = scmp.eq.s32.totalorder %s32, 1
      %p92 = por %p90, %p91
      %p93 = scmp.ne.s32.totalorder %s84, %s85
      %p94 = scmp.eq.s32.totalorder %s32, 0
      %p95 = por %p93, %p94
      %p96 = scmp.ne.s32.totalorder %s84, %s85
      %p97 = scmp.eq.s32.totalorder %s33, 1
      %p98 = por %p96, %p97
      %p100 = scmp.ne.s32.totalorder %s85, %s99
      %p101 = scmp.eq.s32.totalorder %s33, 0
      %p102 = por %p100, %p101
      %s104 = sadd.s32 %s103, 1
      %p107 = scmp.eq.s32.totalorder %s27, 1
      %p108 = scmp.ne.s32.totalorder %s103, %s105
      %p109 = scmp.eq.s32.totalorder %s27, 0
      %p110 = por %p108, %p109
      %p111 = scmp.ne.s32.totalorder %s103, %s105
      %p112 = scmp.eq.s32.totalorder %s32, 1
      %p113 = por %p111, %p112
      %p114 = scmp.ne.s32.totalorder %s105, %s106
      %p115 = scmp.eq.s32.totalorder %s32, 0
      %p116 = por %p114, %p115
      %p117 = scmp.ne.s32.totalorder %s105, %s106
      %p118 = scmp.eq.s32.totalorder %s33, 1
      %p119 = por %p117, %p118
      %p121 = scmp.ne.s32.totalorder %s106, %s120
      %p122 = scmp.eq.s32.totalorder %s33, 0
      %p123 = por %p121, %p122
      %s125 = sadd.s32 %s124, 1
      %p128 = scmp.eq.s32.totalorder %s27, 1
      %p129 = scmp.ne.s32.totalorder %s124, %s126
      %p130 = scmp.eq.s32.totalorder %s27, 0
      %p131 = por %p129, %p130
      %p132 = scmp.ne.s32.totalorder %s124, %s126
      %p133 = scmp.eq.s32.totalorder %s32, 1
      %p134 = por %p132, %p133
      %p135 = scmp.ne.s32.totalorder %s126, %s127
      %p136 = scmp.eq.s32.totalorder %s32, 0
      %p137 = por %p135, %p136
      %p138 = scmp.ne.s32.totalorder %s126, %s127
      %p139 = scmp.eq.s32.totalorder %s33, 1
      %p140 = por %p138, %p139
      %p142 = scmp.ne.s32.totalorder %s127, %s141
      %p143 = scmp.eq.s32.totalorder %s33, 0
      %p144 = por %p142, %p143
      %s146 = sadd.s32 %s145, 1
      %p149 = scmp.eq.s32.totalorder %s27, 1
      %p150 = scmp.ne.s32.totalorder %s145, %s147
      %p151 = scmp.eq.s32.totalorder %s27, 0
      %p152 = por %p150, %p151
      %p153 = scmp.ne.s32.totalorder %s145, %s147
      %p154 = scmp.eq.s32.totalorder %s32, 1
      %p155 = por %p153, %p154
      %p156 = scmp.ne.s32.totalorder %s147, %s148
      %p157 = scmp.eq.s32.totalorder %s32, 0
      %p158 = por %p156, %p157
      %p159 = scmp.ne.s32.totalorder %s147, %s148
      %p160 = scmp.eq.s32.totalorder %s33, 1
      %p161 = por %p159, %p160
      %p163 = scmp.ne.s32.totalorder %s148, %s162
      %p164 = scmp.eq.s32.totalorder %s33, 0
      %p165 = por %p163, %p164
      %s167 = sadd.s32 %s166, 1
      %p170 = scmp.eq.s32.totalorder %s27, 1
      %p171 = scmp.ne.s32.totalorder %s166, %s168
      %p172 = scmp.eq.s32.totalorder %s27, 0
      %p173 = por %p171, %p172
      %p174 = scmp.ne.s32.totalorder %s166, %s168
      %p175 = scmp.eq.s32.totalorder %s32, 1
      %p176 = por %p174, %p175
      %p177 = scmp.ne.s32.totalorder %s168, %s169
      %p178 = scmp.eq.s32.totalorder %s32, 0
      %p179 = por %p177, %p178
      %p180 = scmp.ne.s32.totalorder %s168, %s169
      %p181 = scmp.eq.s32.totalorder %s33, 1
      %p182 = por %p180, %p181
      %p184 = scmp.ne.s32.totalorder %s169, %s183
      %p185 = scmp.eq.s32.totalorder %s33, 0
      %p186 = por %p184, %p185
      %s188 = sadd.s32 %s187, 1
      %p191 = scmp.eq.s32.totalorder %s27, 1
      %p192 = scmp.ne.s32.totalorder %s187, %s189
      %p193 = scmp.eq.s32.totalorder %s27, 0
      %p194 = por %p192, %p193
      %p195 = scmp.ne.s32.totalorder %s187, %s189
      %p196 = scmp.eq.s32.totalorder %s32, 1
      %p197 = por %p195, %p196
      %p198 = scmp.ne.s32.totalorder %s189, %s190
      %p199 = scmp.eq.s32.totalorder %s32, 0
      %p200 = por %p198, %p199
      %p201 = scmp.ne.s32.totalorder %s189, %s190
      %p202 = scmp.eq.s32.totalorder %s33, 1
      %p203 = por %p201, %p202
      %p205 = scmp.ne.s32.totalorder %s190, %s204
      %p206 = scmp.eq.s32.totalorder %s33, 0
      %p207 = por %p205, %p206
      %s209 = sadd.s32 %s208, 1
      %p212 = scmp.eq.s32.totalorder %s27, 1
      %p213 = scmp.ne.s32.totalorder %s208, %s210
      %p214 = scmp.eq.s32.totalorder %s27, 0
      %p215 = por %p213, %p214
      %p216 = scmp.ne.s32.totalorder %s208, %s210
      %p217 = scmp.eq.s32.totalorder %s32, 1
      %p218 = por %p216, %p217
      %p219 = scmp.ne.s32.totalorder %s210, %s211
      %p220 = scmp.eq.s32.totalorder %s32, 0
      %p221 = por %p219, %p220
      %p222 = scmp.ne.s32.totalorder %s210, %s211
      %p223 = scmp.eq.s32.totalorder %s33, 1
      %p224 = por %p222, %p223
      %p226 = scmp.ne.s32.totalorder %s211, %s225
      %p227 = scmp.eq.s32.totalorder %s33, 0
      %p228 = por %p226, %p227
      %s230 = sadd.s32 %s229, 1
      %p233 = scmp.eq.s32.totalorder %s27, 1
      %p234 = scmp.ne.s32.totalorder %s229, %s231
      %p235 = scmp.eq.s32.totalorder %s27, 0
      %p236 = por %p234, %p235
      %p237 = scmp.ne.s32.totalorder %s229, %s231
      %p238 = scmp.eq.s32.totalorder %s32, 1
      %p239 = por %p237, %p238
      %p240 = scmp.ne.s32.totalorder %s231, %s232
      %p241 = scmp.eq.s32.totalorder %s32, 0
      %p242 = por %p240, %p241
      %p243 = scmp.ne.s32.totalorder %s231, %s232
      %p244 = scmp.eq.s32.totalorder %s33, 1
      %p245 = por %p243, %p244
      %p247 = scmp.ne.s32.totalorder %s232, %s246
      %p248 = scmp.eq.s32.totalorder %s33, 0
      %p249 = por %p247, %p248
      %s251 = sadd.s32 %s250, 1
      %p254 = scmp.eq.s32.totalorder %s27, 1
      %p255 = scmp.ne.s32.totalorder %s250, %s252
      %p256 = scmp.eq.s32.totalorder %s27, 0
      %p257 = por %p255, %p256
      %p258 = scmp.ne.s32.totalorder %s250, %s252
      %p259 = scmp.eq.s32.totalorder %s32, 1
      %p260 = por %p258, %p259
      %p261 = scmp.ne.s32.totalorder %s252, %s253
      %p262 = scmp.eq.s32.totalorder %s32, 0
      %p263 = por %p261, %p262
      %p264 = scmp.ne.s32.totalorder %s252, %s253
      %p265 = scmp.eq.s32.totalorder %s33, 1
      %p266 = por %p264, %p265
      %p268 = scmp.ne.s32.totalorder %s253, %s267
      %p269 = scmp.eq.s32.totalorder %s33, 0
      %p270 = por %p268, %p269
      %s272 = sadd.s32 %s271, 1
      %p275 = scmp.eq.s32.totalorder %s27, 1
      %p276 = scmp.ne.s32.totalorder %s271, %s273
      %p277 = scmp.eq.s32.totalorder %s27, 0
      %p278 = por %p276, %p277
      %p279 = scmp.ne.s32.totalorder %s271, %s273
      %p280 = scmp.eq.s32.totalorder %s32, 1
      %p281 = por %p279, %p280
      %p282 = scmp.ne.s32.totalorder %s273, %s274
      %p283 = scmp.eq.s32.totalorder %s32, 0
      %p284 = por %p282, %p283
      %p285 = scmp.ne.s32.totalorder %s273, %s274
      %p286 = scmp.eq.s32.totalorder %s33, 1
      %p287 = por %p285, %p286
      %p289 = scmp.ne.s32.totalorder %s274, %s288
      %p290 = scmp.eq.s32.totalorder %s33, 0
      %p291 = por %p289, %p290
      %s293 = sadd.s32 %s292, 1
      %p296 = scmp.eq.s32.totalorder %s27, 1
      %p297 = scmp.ne.s32.totalorder %s292, %s294
      %p298 = scmp.eq.s32.totalorder %s27, 0
      %p299 = por %p297, %p298
      %p300 = scmp.ne.s32.totalorder %s292, %s294
      %p301 = scmp.eq.s32.totalorder %s32, 1
      %p302 = por %p300, %p301
      %p303 = scmp.ne.s32.totalorder %s294, %s295
      %p304 = scmp.eq.s32.totalorder %s32, 0
      %p305 = por %p303, %p304
      %p306 = scmp.ne.s32.totalorder %s294, %s295
      %p307 = scmp.eq.s32.totalorder %s33, 1
      %p308 = por %p306, %p307
      %p310 = scmp.ne.s32.totalorder %s295, %s309
      %p311 = scmp.eq.s32.totalorder %s33, 0
      %p312 = por %p310, %p311
      %s313 = ssub.s32 %s27, %s34
      %p314 = scmp.eq.s32.totalorder %s313, 0
      %s316 = sadd.s32 %s315, 1
      %s317 = scalar_select %p314, %s315, %s316
      %p320 = pneg %p314
      %p321 = scmp.eq.s32.totalorder %s27, 1
      %p322 = por %p320, %p321
      %p323 = scmp.ne.s32.totalorder %s315, %s318
      %p324 = scmp.eq.s32.totalorder %s27, 0
      %p325 = por %p323, %p324
      %p326 = scmp.ne.s32.totalorder %s315, %s318
      %p327 = scmp.eq.s32.totalorder %s32, 1
      %p328 = por %p326, %p327
      %p329 = scmp.ne.s32.totalorder %s318, %s319
      %p330 = scmp.eq.s32.totalorder %s32, 0
      %p331 = por %p329, %p330
      %p332 = scmp.ne.s32.totalorder %s318, %s319
      %p333 = scmp.eq.s32.totalorder %s33, 1
      %p334 = por %p332, %p333
      %p336 = scmp.ne.s32.totalorder %s319, %s335
      %p337 = scmp.eq.s32.totalorder %s33, 0
      %p338 = por %p336, %p337
      %p339 = scmp.le.s32.totalorder 1, %s27
      %p340 = scmp.lt.s32.totalorder %s27, 3
      %p341 = pnand %p339, %p340
      %p342 = pneg %p341
      // Predicated region
      $region9: #{tpu_custom_call.1} parent=5 // pred_check
        _
      $region10: #{tpu_custom_call.1} parent=5 // pred_check_branch
        %344 = sbr.rel (%p341) target = $region12
      $region11: #{tpu_custom_call.1} parent=5 // pred_region
        %s345 = ssub.s32 %s27, 1
        // Predicated region
        $region13: #{tpu_custom_call.1} parent=11 // pred_check
          %p346 = pneg %p74
        $region14: #{tpu_custom_call.1} parent=11 // pred_check_branch
          %348 = sbr.rel (%p346) target = $region16
        $region15: #{tpu_custom_call.1} parent=11 // pred_region
          %s350 = ssub.s32 16, 16
          %351 = vsyncadd [#allocation3], %s350
          %s353 = sshll.u32 [#allocation2], 4
          %s354 = int_to_ptr.vmem [resolvable:$true] %s353
          %356 = dma.hbm_to_vmem [thread:$0]  %s1, 16, %s354, [#allocation3]
        $region16: #{tpu_custom_call.1} parent=11 // pred_fallthru
          _
        // Predicated region
        $region17: #{tpu_custom_call.1} parent=11 // pred_check
          %p357 = pneg %p95
        $region18: #{tpu_custom_call.1} parent=11 // pred_check_branch
          %359 = sbr.rel (%p357) target = $region20
        $region19: #{tpu_custom_call.1} parent=11 // pred_region
          %s361 = ssub.s32 16, 16
          %362 = vsyncadd [#allocation6], %s361
          %s364 = sshll.u32 [#allocation5], 4
          %s365 = int_to_ptr.vmem [resolvable:$true] %s364
          %367 = dma.hbm_to_vmem [thread:$0]  %s2, 16, %s365, [#allocation6]
        $region20: #{tpu_custom_call.1} parent=11 // pred_fallthru
          _
        // Predicated region
        $region21: #{tpu_custom_call.1} parent=11 // pred_check
          %p368 = pneg %p116
        $region22: #{tpu_custom_call.1} parent=11 // pred_check_branch
          %370 = sbr.rel (%p368) target = $region24
        $region23: #{tpu_custom_call.1} parent=11 // pred_region
          _
        $region24: #{tpu_custom_call.1} parent=11 // pred_fallthru
          _
        // Predicated region
        $region25: #{tpu_custom_call.1} parent=11 // pred_check
          %p371 = pneg %p137
        $region26: #{tpu_custom_call.1} parent=11 // pred_check_branch
          %373 = sbr.rel (%p371) target = $region28
        $region27: #{tpu_custom_call.1} parent=11 // pred_region
          %s375 = ssub.s32 16, 16
          %376 = vsyncadd [#allocation6], %s375
          %s378 = sshll.u32 [#allocation7], 4
          %s379 = int_to_ptr.vmem [resolvable:$true] %s378
          %381 = dma.hbm_to_vmem [thread:$0]  %s4, 16, %s379, [#allocation6]
        $region28: #{tpu_custom_call.1} parent=11 // pred_fallthru
          _
        // Predicated region
        $region29: #{tpu_custom_call.1} parent=11 // pred_check
          %p382 = pneg %p158
        $region30: #{tpu_custom_call.1} parent=11 // pred_check_branch
          %384 = sbr.rel (%p382) target = $region32
        $region31: #{tpu_custom_call.1} parent=11 // pred_region
          _
        $region32: #{tpu_custom_call.1} parent=11 // pred_fallthru
          _
        // Predicated region
        $region33: #{tpu_custom_call.1} parent=11 // pred_check
          %p385 = pneg %p179
        $region34: #{tpu_custom_call.1} parent=11 // pred_check_branch
          %387 = sbr.rel (%p385) target = $region36
        $region35: #{tpu_custom_call.1} parent=11 // pred_region
          %s389 = ssub.s32 16, 16
          %390 = vsyncadd [#allocation9], %s389
          %s392 = sshll.u32 [#allocation8], 4
          %s393 = int_to_ptr.vmem [resolvable:$true] %s392
          %395 = dma.hbm_to_vmem [thread:$0]  %s6, 16, %s393, [#allocation9]
        $region36: #{tpu_custom_call.1} parent=11 // pred_fallthru
          _
        // Predicated region
        $region37: #{tpu_custom_call.1} parent=11 // pred_check
          %p396 = pneg %p200
        $region38: #{tpu_custom_call.1} parent=11 // pred_check_branch
          %398 = sbr.rel (%p396) target = $region40
        $region39: #{tpu_custom_call.1} parent=11 // pred_region
          %s400 = ssub.s32 256, 256
          %401 = vsyncadd [#allocation9], %s400
          %s402 = sshll.u32 [#allocation10], 4
          %s403 = int_to_ptr.vmem [resolvable:$true] %s402
          %408 = dma.hbm_to_vmem [thread:$0]  %s7, 256, %s403, [#allocation9], 64, 64, 4
        $region40: #{tpu_custom_call.1} parent=11 // pred_fallthru
          _
        // Predicated region
        $region41: #{tpu_custom_call.1} parent=11 // pred_check
          %p409 = pneg %p221
        $region42: #{tpu_custom_call.1} parent=11 // pred_check_branch
          %411 = sbr.rel (%p409) target = $region44
        $region43: #{tpu_custom_call.1} parent=11 // pred_region
          %s413 = ssub.s32 16, 16
          %414 = vsyncadd [#allocation12], %s413
          %s416 = sshll.u32 [#allocation11], 4
          %s417 = int_to_ptr.vmem [resolvable:$true] %s416
          %419 = dma.hbm_to_vmem [thread:$0]  %s8, 16, %s417, [#allocation12]
        $region44: #{tpu_custom_call.1} parent=11 // pred_fallthru
          _
        // Predicated region
        $region45: #{tpu_custom_call.1} parent=11 // pred_check
          %p420 = pneg %p242
        $region46: #{tpu_custom_call.1} parent=11 // pred_check_branch
          %422 = sbr.rel (%p420) target = $region48
        $region47: #{tpu_custom_call.1} parent=11 // pred_region
          _
        $region48: #{tpu_custom_call.1} parent=11 // pred_fallthru
          _
        // Predicated region
        $region49: #{tpu_custom_call.1} parent=11 // pred_check
          %p423 = pneg %p263
        $region50: #{tpu_custom_call.1} parent=11 // pred_check_branch
          %425 = sbr.rel (%p423) target = $region52
        $region51: #{tpu_custom_call.1} parent=11 // pred_region
          _
        $region52: #{tpu_custom_call.1} parent=11 // pred_fallthru
          _
        // Predicated region
        $region53: #{tpu_custom_call.1} parent=11 // pred_check
          %p426 = pneg %p284
        $region54: #{tpu_custom_call.1} parent=11 // pred_check_branch
          %428 = sbr.rel (%p426) target = $region56
        $region55: #{tpu_custom_call.1} parent=11 // pred_region
          %s430 = ssub.s32 128, 128
          %431 = vsyncadd [#allocation12], %s430
          %s433 = sshll.u32 [#allocation13], 4
          %s434 = int_to_ptr.vmem [resolvable:$true] %s433
          %436 = dma.hbm_to_vmem [thread:$0]  %s11, 128, %s434, [#allocation12]
        $region56: #{tpu_custom_call.1} parent=11 // pred_fallthru
          _
        // Predicated region
        $region57: #{tpu_custom_call.1} parent=11 // pred_check
          %p437 = pneg %p305
        $region58: #{tpu_custom_call.1} parent=11 // pred_check_branch
          %439 = sbr.rel (%p437) target = $region60
        $region59: #{tpu_custom_call.1} parent=11 // pred_region
          %s441 = ssub.s32 128, 128
          %442 = vsyncadd [#allocation15], %s441
          %s444 = sshll.u32 [#allocation14], 4
          %s445 = int_to_ptr.vmem [resolvable:$true] %s444
          %447 = dma.hbm_to_vmem [thread:$0]  %s12, 128, %s445, [#allocation15]
        $region60: #{tpu_custom_call.1} parent=11 // pred_fallthru
          _
      $region12: #{tpu_custom_call.1} parent=5 // pred_fallthru
        _
      %p448 = scmp.lt.s32.totalorder %s27, 2
      // Predicated region
      $region61: #{tpu_custom_call.1} parent=5 // pred_check
        %p449 = pneg %p448
      $region62: #{tpu_custom_call.1} parent=5 // pred_check_branch
        %451 = sbr.rel (%p449) target = $region64
      $region63: #{tpu_custom_call.1} parent=5 // pred_region
        // Predicated region
        $region65: #{tpu_custom_call.1} parent=63 // pred_check
          %p452 = pneg %p47
        $region66: #{tpu_custom_call.1} parent=63 // pred_check_branch
          %454 = sbr.rel (%p452) target = $region68
        $region67: #{tpu_custom_call.1} parent=63 // pred_region
          %p455 = scmp.lt.s32.totalorder %s27, 1
          %s456 = scalar_select %p455, %s27, 1
          %s457 = smul.addr %s456, 8
          %s458 = scalar_lea.vmem %s0, %s457
        $region68: #{tpu_custom_call.1} parent=63 // pred_fallthru
          _
      $region64: #{tpu_custom_call.1} parent=5 // pred_fallthru
        _
      %p459 = scmp.le.s32.totalorder 1, %s27
      %p460 = scmp.lt.s32.totalorder %s27, 3
      %p461 = pnand %p459, %p460
      %p462 = pneg %p461
      // Predicated region
      $region69: #{tpu_custom_call.1} parent=5 // pred_check
        _
      $region70: #{tpu_custom_call.1} parent=5 // pred_check_branch
        %464 = sbr.rel (%p461) target = $region72
      $region71: #{tpu_custom_call.1} parent=5 // pred_region
        %s465 = ssub.s32 %s27, 1
        // Predicated region
        $region73: #{tpu_custom_call.1} parent=71 // pred_check
          %p466 = pneg %p74
        $region74: #{tpu_custom_call.1} parent=71 // pred_check_branch
          %468 = sbr.rel (%p466) target = $region76
        $region75: #{tpu_custom_call.1} parent=71 // pred_region
          %469 = dma.done [#allocation3], 16
        $region76: #{tpu_custom_call.1} parent=71 // pred_fallthru
          _
        // Predicated region
        $region77: #{tpu_custom_call.1} parent=71 // pred_check
          %p470 = pneg %p95
        $region78: #{tpu_custom_call.1} parent=71 // pred_check_branch
          %472 = sbr.rel (%p470) target = $region80
        $region79: #{tpu_custom_call.1} parent=71 // pred_region
          %473 = dma.done [#allocation6], 16
        $region80: #{tpu_custom_call.1} parent=71 // pred_fallthru
          _
        // Predicated region
        $region81: #{tpu_custom_call.1} parent=71 // pred_check
          %p474 = pneg %p137
        $region82: #{tpu_custom_call.1} parent=71 // pred_check_branch
          %476 = sbr.rel (%p474) target = $region84
        $region83: #{tpu_custom_call.1} parent=71 // pred_region
          %477 = dma.done [#allocation6], 16
        $region84: #{tpu_custom_call.1} parent=71 // pred_fallthru
          _
        // Predicated region
        $region85: #{tpu_custom_call.1} parent=71 // pred_check
          %p478 = pneg %p179
        $region86: #{tpu_custom_call.1} parent=71 // pred_check_branch
          %480 = sbr.rel (%p478) target = $region88
        $region87: #{tpu_custom_call.1} parent=71 // pred_region
          %481 = dma.done [#allocation9], 16
        $region88: #{tpu_custom_call.1} parent=71 // pred_fallthru
          _
        // Predicated region
        $region89: #{tpu_custom_call.1} parent=71 // pred_check
          %p482 = pneg %p200
        $region90: #{tpu_custom_call.1} parent=71 // pred_check_branch
          %484 = sbr.rel (%p482) target = $region92
        $region91: #{tpu_custom_call.1} parent=71 // pred_region
          %485 = dma.done [#allocation9], 256
        $region92: #{tpu_custom_call.1} parent=71 // pred_fallthru
          _
        // Predicated region
        $region93: #{tpu_custom_call.1} parent=71 // pred_check
          %p486 = pneg %p221
        $region94: #{tpu_custom_call.1} parent=71 // pred_check_branch
          %488 = sbr.rel (%p486) target = $region96
        $region95: #{tpu_custom_call.1} parent=71 // pred_region
          %489 = dma.done [#allocation12], 16
        $region96: #{tpu_custom_call.1} parent=71 // pred_fallthru
          _
        // Predicated region
        $region97: #{tpu_custom_call.1} parent=71 // pred_check
          %p490 = pneg %p284
        $region98: #{tpu_custom_call.1} parent=71 // pred_check_branch
          %492 = sbr.rel (%p490) target = $region100
        $region99: #{tpu_custom_call.1} parent=71 // pred_region
          %493 = dma.done [#allocation12], 128
        $region100: #{tpu_custom_call.1} parent=71 // pred_fallthru
          _
        // Predicated region
        $region101: #{tpu_custom_call.1} parent=71 // pred_check
          %p494 = pneg %p305
        $region102: #{tpu_custom_call.1} parent=71 // pred_check_branch
          %496 = sbr.rel (%p494) target = $region104
        $region103: #{tpu_custom_call.1} parent=71 // pred_region
          %497 = dma.done [#allocation15], 128
        $region104: #{tpu_custom_call.1} parent=71 // pred_fallthru
          _
        %p498 = scmp.lt.s32.totalorder %s32, 1
        %s499 = scalar_select %p498, %s32, 1
        %s500 = smul.addr %s499, 8
        %s501 = scalar_lea.vmem %s0, %s500
        %p502 = pneg %p53
        %p503 = pneg %p50
        %p504 = pneg %p74
        %p505 = pneg %p71
        %p506 = pneg %p95
        %p507 = pneg %p92
        %p508 = pneg %p116
        %p509 = pneg %p113
        %p510 = pneg %p137
        %p511 = pneg %p134
        %p512 = pneg %p158
        %p513 = pneg %p155
        %p514 = pneg %p179
        %p515 = pneg %p176
        %p516 = pneg %p200
        %p517 = pneg %p197
        %p518 = pneg %p221
        %p519 = pneg %p218
        %p520 = pneg %p242
        %p521 = pneg %p239
        %p522 = pneg %p263
        %p523 = pneg %p260
        %p524 = pneg %p284
        %p525 = pneg %p281
        %p526 = pneg %p305
        %p527 = pneg %p302
        %p528 = pneg %p331
        %p529 = pneg %p328
        %s530 = sand.u32 %s318, 1
        %s531 = scalar_lea.sflag [#allocation4], %s530
        %s532 = sand.u32 %s318, 1
        %s533 = smul.addr %s532, 8
        %s534 = scalar_lea.vmem [#allocation16], %s533
        %p535 = scmp.lt.s32.totalorder %s32, 1
        %s536 = scalar_select %p535, %s32, 1
        %s537 = smul.addr %s536, 8
        %s538 = scalar_lea.vmem %s0, %s537
        %v540 = vld [vmem:[%s538] sm:$0xff]
        %v541 = vmul.f32 %v540, %v540
        %vm542 = vcmask 261120
        %v543 = vsel %vm542, %v541, 0.0
        %544 = vadd.xlane.f32.xlu0 %v543
        %v545 = vpop.xlane.xlu0 %544
        %v546 = vrcp.pop 32.0
        %v547 = vmul.f32 %v545, %v546
        %v548 = vadd.f32 %v547, 1e-06
        %v549 = vrsqrt.pop %v548
        %v550 = vld [vmem:[#allocation2] sm:$0x1]
        %v552 = vlaneseq
        %v553 = vshrl.u32 %v552, 7
        %v554 = vsub.s32 0, %v553
        %v555 = vrot.slane %v550, %v554
        %v557 = vmul.f32 %v555, %v540
        %v558 = vmul.f32 %v557, %v549
        %v559 = vpack.c.bf16 %v558, %v558
        %v560 = vld [vmem:[%s3] sm:$0xf]
        %v561 = vld [vmem:[%s3 + $0x4] sm:$0xf]
        %v562 = vld [vmem:[%s3 + $0x8] sm:$0xf]
        %v563 = vld [vmem:[%s3 + $0xc] sm:$0xf]
        %v564 = vld [vmem:[#allocation7] sm:$0x1]
        %v566 = vlaneseq
        %v567 = vshrl.u32 %v566, 7
        %v568 = vsub.s32 0, %v567
        %v569 = vrot.slane %v564, %v568
        %v575 = vunpack.c.l.b16 %v560
        %v576 = vunpack.c.l.b16 %v561
        %v577 = vunpack.c.l.b16 %v562
        %v578 = vunpack.c.l.b16 %v563
        %v579 = vpack.c.b16 %v576, %v575
        %v580 = vpack.c.b16 %v578, %v577
        %v584 = vsel %vm542, %v559, 0
        %586 = vmatprep.subr.bf16.mxu0 0
        %587 = vmatpush1.bf16.msra.mxu0 0
        %588 = vmatprep.subr.bf16.mxu0 0
        %589 = vmatpush1.bf16.msra.mxu0 0
        %590 = vmatprep.subr.bf16.mxu0 0
        %591 = vmatpush1.bf16.msra.mxu0 0
        %592 = vmatprep.subr.bf16.mxu0 0
        %593 = vmatpush1.bf16.msra.mxu0 0
        %594 = vmatprep.subr.bf16.mxu0 0
        %595 = vmatpush1.bf16.msra.mxu0 0
        %596 = vmatprep.subr.bf16.mxu0 0
        %597 = vmatpush1.bf16.msra.mxu0 0
        %598 = vmatprep.subr.bf16.mxu0 0
        %599 = vmatpush1.bf16.msra.mxu0 %v580
        %600 = vmatprep.subr.bf16.mxu0 0
        %601 = vmatpush1.bf16.msra.mxu0 %v579
        %602 = vmatprep.subr.bf16.mxu0 0
        %603 = vmatpush2.bf16.msra.mxu0 0
        %604 = vmatprep.subr.bf16.mxu0 0
        %605 = vmatpush2.bf16.msra.mxu0 0
        %606 = vmatprep.subr.bf16.mxu0 0
        %607 = vmatpush2.bf16.msra.mxu0 0
        %608 = vmatprep.subr.bf16.mxu0 0
        %609 = vmatpush2.bf16.msra.mxu0 0
        %610 = vmatprep.subr.bf16.mxu0 0
        %611 = vmatpush2.bf16.msra.mxu0 0
        %612 = vmatprep.subr.bf16.mxu0 0
        %613 = vmatpush2.bf16.msra.mxu0 0
        %614 = vmatprep.subr.bf16.mxu0 0
        %615 = vmatpush2.bf16.msra.mxu0 0
        %616 = vmatprep.subr.bf16.mxu0 0
        %617 = vmatpush2.bf16.msra.mxu0 0
        %618 = vmatprep.mubr.bf16.mxu0 0
        %619 = vmatmul.mubr.bf16.gmra.mxu0 %v584
        %v620 = vpop.f32.mrf.mxu0
        %v621 = vadd.f32 %v569, %v620
        %v622 = vpop.f32.mrf.mxu0
        %v623 = vpop.f32.mrf.mxu0
        %v624 = vpop.f32.mrf.mxu0
        %625 = vdwg.mxu0
        %627 = vrot.lane.b32.xlu0 %v621, 120
        %v628 = vpop.permute.xlu0 %627
        %v630 = vcombine.high %v621, 0.0
        %v632 = vunpack.c.l.s4 1983009808
        %v633 = vunpack.c.0.s8 %v632
        %v634 = vlaneseq
        %v635 = vshrl.u32 %v634, 7
        %v636 = vsub.s32 %v633, %v635
        %v637 = vrot.slane %v621, %v636
        %v639 = vunpack.c.l.s4 1983009808
        %v640 = vunpack.c.0.s8 %v639
        %v641 = vlaneseq
        %v642 = vshrl.u32 %v641, 7
        %v643 = vsub.s32 %v640, %v642
        %v644 = vrot.slane %v630, %v643
        %v645 = vcombine.high %v628, 0.0
        %v647 = vunpack.c.l.s4 1983009808
        %v648 = vunpack.c.0.s8 %v647
        %v649 = vlaneseq
        %v650 = vshrl.u32 %v649, 7
        %v651 = vsub.s32 %v648, %v650
        %v652 = vrot.slane %v628, %v651
        %v654 = vunpack.c.l.s4 1983009808
        %v655 = vunpack.c.0.s8 %v654
        %v656 = vlaneseq
        %v657 = vshrl.u32 %v656, 7
        %v658 = vsub.s32 %v655, %v657
        %v659 = vrot.slane %v645, %v658
        %v660 = vcombine.low %v637, %v652
        %v661 = vcombine.high %v637, %v652
        %v663 = vunpack.c.l.s4 1934713408
        %v664 = vunpack.c.0.s8 %v663
        %v665 = vlaneseq
        %v666 = vshrl.u32 %v665, 7
        %v667 = vsub.s32 %v664, %v666
        %v668 = vrot.slane %v660, %v667
        %v670 = vunpack.c.l.s4 1934713408
        %v671 = vunpack.c.0.s8 %v670
        %v672 = vlaneseq
        %v673 = vshrl.u32 %v672, 7
        %v674 = vsub.s32 %v671, %v673
        %v675 = vrot.slane %v661, %v674
        %v676 = vcombine.low %v644, %v659
        %v677 = vcombine.high %v644, %v659
        %v679 = vunpack.c.l.s4 1934713408
        %v680 = vunpack.c.0.s8 %v679
        %v681 = vlaneseq
        %v682 = vshrl.u32 %v681, 7
        %v683 = vsub.s32 %v680, %v682
        %v684 = vrot.slane %v676, %v683
        %v686 = vunpack.c.l.s4 1934713408
        %v687 = vunpack.c.0.s8 %v686
        %v688 = vlaneseq
        %v689 = vshrl.u32 %v688, 7
        %v690 = vsub.s32 %v687, %v689
        %v691 = vrot.slane %v677, %v690
        %v692 = vcombine.high %v668, 0.0
        %v693 = vcombine.high %v675, 0.0
        %v694 = vcombine.high %v684, 0.0
        %v695 = vcombine.high %v691, 0.0
        %696 = vrot.lane.b32.xlu0 %v621, 112
        %v697 = vpop.permute.xlu0 %696
        %698 = vrot.lane.b32.xlu0 %v621, 104
        %v699 = vpop.permute.xlu0 %698
        %700 = vrot.lane.b32.xlu0 %v628, 112
        %v701 = vpop.permute.xlu0 %700
        %702 = vrot.lane.b32.xlu0 %v697, 112
        %v703 = vpop.permute.xlu0 %702
        %704 = vrot.lane.b32.xlu0 %v699, 112
        %v705 = vpop.permute.xlu0 %704
        %v710 = vcombine.low %v697, %v703
        %v711 = vcombine.high %v697, %v703
        %v713 = vunpack.c.l.s4 1983009808
        %v714 = vunpack.c.0.s8 %v713
        %v715 = vlaneseq
        %v716 = vshrl.u32 %v715, 7
        %v717 = vsub.s32 %v714, %v716
        %v718 = vrot.slane %v710, %v717
        %v720 = vunpack.c.l.s4 1983009808
        %v721 = vunpack.c.0.s8 %v720
        %v722 = vlaneseq
        %v723 = vshrl.u32 %v722, 7
        %v724 = vsub.s32 %v721, %v723
        %v725 = vrot.slane %v711, %v724
        %v726 = vcombine.low %v701, %v705
        %v727 = vcombine.high %v701, %v705
        %v729 = vunpack.c.l.s4 1983009808
        %v730 = vunpack.c.0.s8 %v729
        %v731 = vlaneseq
        %v732 = vshrl.u32 %v731, 7
        %v733 = vsub.s32 %v730, %v732
        %v734 = vrot.slane %v726, %v733
        %v736 = vunpack.c.l.s4 1983009808
        %v737 = vunpack.c.0.s8 %v736
        %v738 = vlaneseq
        %v739 = vshrl.u32 %v738, 7
        %v740 = vsub.s32 %v737, %v739
        %v741 = vrot.slane %v727, %v740
        %v742 = vcombine.low %v718, %v734
        %v743 = vcombine.high %v718, %v734
        %v745 = vunpack.c.l.s4 1934713408
        %v746 = vunpack.c.0.s8 %v745
        %v747 = vlaneseq
        %v748 = vshrl.u32 %v747, 7
        %v749 = vsub.s32 %v746, %v748
        %v750 = vrot.slane %v742, %v749
        %v752 = vunpack.c.l.s4 1934713408
        %v753 = vunpack.c.0.s8 %v752
        %v754 = vlaneseq
        %v755 = vshrl.u32 %v754, 7
        %v756 = vsub.s32 %v753, %v755
        %v757 = vrot.slane %v743, %v756
        %v758 = vcombine.low %v725, %v741
        %v759 = vcombine.high %v725, %v741
        %v761 = vunpack.c.l.s4 1934713408
        %v762 = vunpack.c.0.s8 %v761
        %v763 = vlaneseq
        %v764 = vshrl.u32 %v763, 7
        %v765 = vsub.s32 %v762, %v764
        %v766 = vrot.slane %v758, %v765
        %v768 = vunpack.c.l.s4 1934713408
        %v769 = vunpack.c.0.s8 %v768
        %v770 = vlaneseq
        %v771 = vshrl.u32 %v770, 7
        %v772 = vsub.s32 %v769, %v771
        %v773 = vrot.slane %v759, %v772
        %v774 = vcombine.high %v750, 0.0
        %v775 = vcombine.high %v757, 0.0
        %v776 = vcombine.high %v766, 0.0
        %v777 = vcombine.high %v773, 0.0
        %778 = vrot.lane.b32.xlu0 %v621, 80
        %v779 = vpop.permute.xlu0 %778
        %780 = vrot.lane.b32.xlu0 %v628, 80
        %v781 = vpop.permute.xlu0 %780
        %782 = vrot.lane.b32.xlu0 %v697, 80
        %v783 = vpop.permute.xlu0 %782
        %784 = vrot.lane.b32.xlu0 %v699, 80
        %v785 = vpop.permute.xlu0 %784
        %v790 = vcombine.low %v779, %v783
        %v791 = vcombine.high %v779, %v783
        %v793 = vunpack.c.l.s4 1983009808
        %v794 = vunpack.c.0.s8 %v793
        %v795 = vlaneseq
        %v796 = vshrl.u32 %v795, 7
        %v797 = vsub.s32 %v794, %v796
        %v798 = vrot.slane %v790, %v797
        %v800 = vunpack.c.l.s4 1983009808
        %v801 = vunpack.c.0.s8 %v800
        %v802 = vlaneseq
        %v803 = vshrl.u32 %v802, 7
        %v804 = vsub.s32 %v801, %v803
        %v805 = vrot.slane %v791, %v804
        %v806 = vcombine.low %v781, %v785
        %v807 = vcombine.high %v781, %v785
        %v809 = vunpack.c.l.s4 1983009808
        %v810 = vunpack.c.0.s8 %v809
        %v811 = vlaneseq
        %v812 = vshrl.u32 %v811, 7
        %v813 = vsub.s32 %v810, %v812
        %v814 = vrot.slane %v806, %v813
        %v816 = vunpack.c.l.s4 1983009808
        %v817 = vunpack.c.0.s8 %v816
        %v818 = vlaneseq
        %v819 = vshrl.u32 %v818, 7
        %v820 = vsub.s32 %v817, %v819
        %v821 = vrot.slane %v807, %v820
        %v822 = vcombine.low %v798, %v814
        %v823 = vcombine.high %v798, %v814
        %v825 = vunpack.c.l.s4 1934713408
        %v826 = vunpack.c.0.s8 %v825
        %v827 = vlaneseq
        %v828 = vshrl.u32 %v827, 7
        %v829 = vsub.s32 %v826, %v828
        %v830 = vrot.slane %v822, %v829
        %v832 = vunpack.c.l.s4 1934713408
        %v833 = vunpack.c.0.s8 %v832
        %v834 = vlaneseq
        %v835 = vshrl.u32 %v834, 7
        %v836 = vsub.s32 %v833, %v835
        %v837 = vrot.slane %v823, %v836
        %v838 = vcombine.low %v805, %v821
        %v839 = vcombine.high %v805, %v821
        %v841 = vunpack.c.l.s4 1934713408
        %v842 = vunpack.c.0.s8 %v841
        %v843 = vlaneseq
        %v844 = vshrl.u32 %v843, 7
        %v845 = vsub.s32 %v842, %v844
        %v846 = vrot.slane %v838, %v845
        %v848 = vunpack.c.l.s4 1934713408
        %v849 = vunpack.c.0.s8 %v848
        %v850 = vlaneseq
        %v851 = vshrl.u32 %v850, 7
        %v852 = vsub.s32 %v849, %v851
        %v853 = vrot.slane %v839, %v852
        %v854 = vcombine.high %v830, 0.0
        %v855 = vcombine.high %v837, 0.0
        %v856 = vcombine.high %v846, 0.0
        %v857 = vcombine.high %v853, 0.0
        %v858 = vld [vmem:[#allocation13] sm:$0xff]
        %v860 = vcombine.high %v858, %v858
        %v862 = vunpack.c.l.s4 1966171168
        %v863 = vunpack.c.0.s8 %v862
        %v864 = vlaneseq
        %v865 = vshrl.u32 %v864, 7
        %v866 = vsub.s32 %v863, %v865
        %v867 = vrot.slane %v858, %v866
        %v869 = vunpack.c.l.s4 1966171168
        %v870 = vunpack.c.0.s8 %v869
        %v871 = vlaneseq
        %v872 = vshrl.u32 %v871, 7
        %v873 = vsub.s32 %v870, %v872
        %v874 = vrot.slane %v860, %v873
        %v875 = vcombine.high %v867, %v867
        %v876 = vcombine.high %v874, %v874
        %v878 = vunpack.c.l.s4 1966171168
        %v879 = vunpack.c.0.s8 %v878
        %v880 = vlaneseq
        %v881 = vshrl.u32 %v880, 7
        %v882 = vsub.s32 %v879, %v881
        %v883 = vrot.slane %v867, %v882
        %v885 = vunpack.c.l.s4 1966171168
        %v886 = vunpack.c.0.s8 %v885
        %v887 = vlaneseq
        %v888 = vshrl.u32 %v887, 7
        %v889 = vsub.s32 %v886, %v888
        %v890 = vrot.slane %v874, %v889
        %v892 = vunpack.c.l.s4 1966171168
        %v893 = vunpack.c.0.s8 %v892
        %v894 = vlaneseq
        %v895 = vshrl.u32 %v894, 7
        %v896 = vsub.s32 %v893, %v895
        %v897 = vrot.slane %v875, %v896
        %v899 = vunpack.c.l.s4 1966171168
        %v900 = vunpack.c.0.s8 %v899
        %v901 = vlaneseq
        %v902 = vshrl.u32 %v901, 7
        %v903 = vsub.s32 %v900, %v902
        %v904 = vrot.slane %v876, %v903
        %v905 = vcombine.high %v883, %v883
        %v906 = vcombine.high %v890, %v890
        %v907 = vcombine.high %v897, %v897
        %v908 = vcombine.high %v904, %v904
        %v909 = vld [vmem:[#allocation14] sm:$0xff]
        %v911 = vcombine.high %v909, %v909
        %v913 = vunpack.c.l.s4 1966171168
        %v914 = vunpack.c.0.s8 %v913
        %v915 = vlaneseq
        %v916 = vshrl.u32 %v915, 7
        %v917 = vsub.s32 %v914, %v916
        %v918 = vrot.slane %v909, %v917
        %v920 = vunpack.c.l.s4 1966171168
        %v921 = vunpack.c.0.s8 %v920
        %v922 = vlaneseq
        %v923 = vshrl.u32 %v922, 7
        %v924 = vsub.s32 %v921, %v923
        %v925 = vrot.slane %v911, %v924
        %v926 = vcombine.high %v918, %v918
        %v927 = vcombine.high %v925, %v925
        %v929 = vunpack.c.l.s4 1966171168
        %v930 = vunpack.c.0.s8 %v929
        %v931 = vlaneseq
        %v932 = vshrl.u32 %v931, 7
        %v933 = vsub.s32 %v930, %v932
        %v934 = vrot.slane %v918, %v933
        %v936 = vunpack.c.l.s4 1966171168
        %v937 = vunpack.c.0.s8 %v936
        %v938 = vlaneseq
        %v939 = vshrl.u32 %v938, 7
        %v940 = vsub.s32 %v937, %v939
        %v941 = vrot.slane %v925, %v940
        %v943 = vunpack.c.l.s4 1966171168
        %v944 = vunpack.c.0.s8 %v943
        %v945 = vlaneseq
        %v946 = vshrl.u32 %v945, 7
        %v947 = vsub.s32 %v944, %v946
        %v948 = vrot.slane %v926, %v947
        %v950 = vunpack.c.l.s4 1966171168
        %v951 = vunpack.c.0.s8 %v950
        %v952 = vlaneseq
        %v953 = vshrl.u32 %v952, 7
        %v954 = vsub.s32 %v951, %v953
        %v955 = vrot.slane %v927, %v954
        %v956 = vcombine.high %v934, %v934
        %v957 = vcombine.high %v941, %v941
        %v958 = vcombine.high %v948, %v948
        %v959 = vcombine.high %v955, %v955
        %v960 = vlaneseq
        %v961 = vshrl.u32 %v960, 7
        %v962 = vsub.s32 0, %v961
        %v963 = vrot.slane %v883, %v962
        %v964 = vlaneseq
        %v965 = vshrl.u32 %v964, 7
        %v966 = vsub.s32 0, %v965
        %v967 = vrot.slane %v897, %v966
        %v968 = vlaneseq
        %v969 = vshrl.u32 %v968, 7
        %v970 = vsub.s32 0, %v969
        %v971 = vrot.slane %v905, %v970
        %v972 = vlaneseq
        %v973 = vshrl.u32 %v972, 7
        %v974 = vsub.s32 0, %v973
        %v975 = vrot.slane %v907, %v974
        %v976 = vlaneseq
        %v977 = vshrl.u32 %v976, 7
        %v978 = vsub.s32 0, %v977
        %v979 = vrot.slane %v890, %v978
        %v980 = vlaneseq
        %v981 = vshrl.u32 %v980, 7
        %v982 = vsub.s32 0, %v981
        %v983 = vrot.slane %v904, %v982
        %v984 = vlaneseq
        %v985 = vshrl.u32 %v984, 7
        %v986 = vsub.s32 0, %v985
        %v987 = vrot.slane %v906, %v986
        %v988 = vlaneseq
        %v989 = vshrl.u32 %v988, 7
        %v990 = vsub.s32 0, %v989
        %v991 = vrot.slane %v908, %v990
        %v1000 = vmul.f32 %v668, %v963
        %v1001 = vmul.f32 %v692, %v967
        %v1002 = vmul.f32 %v675, %v971
        %v1003 = vmul.f32 %v693, %v975
        %v1004 = vmul.f32 %v684, %v979
        %v1005 = vmul.f32 %v694, %v983
        %v1006 = vmul.f32 %v691, %v987
        %v1007 = vmul.f32 %v695, %v991
        %v1008 = vsub.f32 0.0, %v668
        %v1009 = vsub.f32 0.0, %v692
        %v1010 = vsub.f32 0.0, %v675
        %v1011 = vsub.f32 0.0, %v693
        %v1012 = vsub.f32 0.0, %v684
        %v1013 = vsub.f32 0.0, %v694
        %v1014 = vsub.f32 0.0, %v691
        %v1015 = vsub.f32 0.0, %v695
        %1024 = vrot.lane.b32.xlu0 %v1008, 124
        %v1025 = vpop.permute.xlu0 %1024
        %1026 = vrot.lane.b32.xlu0 %v1009, 124
        %v1027 = vpop.permute.xlu0 %1026
        %1028 = vrot.lane.b32.xlu0 %v1010, 124
        %v1029 = vpop.permute.xlu0 %1028
        %1030 = vrot.lane.b32.xlu0 %v1011, 124
        %v1031 = vpop.permute.xlu0 %1030
        %1032 = vrot.lane.b32.xlu0 %v1012, 124
        %v1033 = vpop.permute.xlu0 %1032
        %1034 = vrot.lane.b32.xlu0 %v1013, 124
        %v1035 = vpop.permute.xlu0 %1034
        %1036 = vrot.lane.b32.xlu0 %v1014, 124
        %v1037 = vpop.permute.xlu0 %1036
        %1038 = vrot.lane.b32.xlu0 %v1015, 124
        %v1039 = vpop.permute.xlu0 %1038
        %1056 = vrot.lane.b32.xlu0 %v668, 4
        %v1057 = vpop.permute.xlu0 %1056
        %1058 = vrot.lane.b32.xlu0 %v692, 4
        %v1059 = vpop.permute.xlu0 %1058
        %1060 = vrot.lane.b32.xlu0 %v675, 4
        %v1061 = vpop.permute.xlu0 %1060
        %1062 = vrot.lane.b32.xlu0 %v693, 4
        %v1063 = vpop.permute.xlu0 %1062
        %1064 = vrot.lane.b32.xlu0 %v684, 4
        %v1065 = vpop.permute.xlu0 %1064
        %1066 = vrot.lane.b32.xlu0 %v694, 4
        %v1067 = vpop.permute.xlu0 %1066
        %1068 = vrot.lane.b32.xlu0 %v691, 4
        %v1069 = vpop.permute.xlu0 %1068
        %1070 = vrot.lane.b32.xlu0 %v695, 4
        %v1071 = vpop.permute.xlu0 %1070
        %vm1080 = vcmask 31744
        %v1081 = vsel %vm1080, %v1025, %v1057
        %v1082 = vsel %vm1080, %v1027, %v1059
        %v1083 = vsel %vm1080, %v1029, %v1061
        %v1084 = vsel %vm1080, %v1031, %v1063
        %v1085 = vsel %vm1080, %v1033, %v1065
        %v1086 = vsel %vm1080, %v1035, %v1067
        %v1087 = vsel %vm1080, %v1037, %v1069
        %v1088 = vsel %vm1080, %v1039, %v1071
        %v1089 = vlaneseq
        %v1090 = vshrl.u32 %v1089, 7
        %v1091 = vsub.s32 0, %v1090
        %v1092 = vrot.slane %v934, %v1091
        %v1093 = vlaneseq
        %v1094 = vshrl.u32 %v1093, 7
        %v1095 = vsub.s32 0, %v1094
        %v1096 = vrot.slane %v948, %v1095
        %v1097 = vlaneseq
        %v1098 = vshrl.u32 %v1097, 7
        %v1099 = vsub.s32 0, %v1098
        %v1100 = vrot.slane %v956, %v1099
        %v1101 = vlaneseq
        %v1102 = vshrl.u32 %v1101, 7
        %v1103 = vsub.s32 0, %v1102
        %v1104 = vrot.slane %v958, %v1103
        %v1105 = vlaneseq
        %v1106 = vshrl.u32 %v1105, 7
        %v1107 = vsub.s32 0, %v1106
        %v1108 = vrot.slane %v941, %v1107
        %v1109 = vlaneseq
        %v1110 = vshrl.u32 %v1109, 7
        %v1111 = vsub.s32 0, %v1110
        %v1112 = vrot.slane %v955, %v1111
        %v1113 = vlaneseq
        %v1114 = vshrl.u32 %v1113, 7
        %v1115 = vsub.s32 0, %v1114
        %v1116 = vrot.slane %v957, %v1115
        %v1117 = vlaneseq
        %v1118 = vshrl.u32 %v1117, 7
        %v1119 = vsub.s32 0, %v1118
        %v1120 = vrot.slane %v959, %v1119
        %v1129 = vmul.f32 %v1081, %v1092
        %v1130 = vmul.f32 %v1082, %v1096
        %v1131 = vmul.f32 %v1083, %v1100
        %v1132 = vmul.f32 %v1084, %v1104
        %v1133 = vmul.f32 %v1085, %v1108
        %v1134 = vmul.f32 %v1086, %v1112
        %v1135 = vmul.f32 %v1087, %v1116
        %v1136 = vmul.f32 %v1088, %v1120
        %v1137 = vadd.f32 %v1000, %v1129
        %v1138 = vadd.f32 %v1001, %v1130
        %v1139 = vadd.f32 %v1002, %v1131
        %v1140 = vadd.f32 %v1003, %v1132
        %v1141 = vadd.f32 %v1004, %v1133
        %v1142 = vadd.f32 %v1005, %v1134
        %v1143 = vadd.f32 %v1006, %v1135
        %v1144 = vadd.f32 %v1007, %v1136
        %v1145 = vmul.f32 %v750, %v963
        %v1146 = vmul.f32 %v774, %v967
        %v1147 = vmul.f32 %v757, %v971
        %v1148 = vmul.f32 %v775, %v975
        %v1149 = vmul.f32 %v766, %v979
        %v1150 = vmul.f32 %v776, %v983
        %v1151 = vmul.f32 %v773, %v987
        %v1152 = vmul.f32 %v777, %v991
        %v1153 = vsub.f32 0.0, %v750
        %v1154 = vsub.f32 0.0, %v774
        %v1155 = vsub.f32 0.0, %v757
        %v1156 = vsub.f32 0.0, %v775
        %v1157 = vsub.f32 0.0, %v766
        %v1158 = vsub.f32 0.0, %v776
        %v1159 = vsub.f32 0.0, %v773
        %v1160 = vsub.f32 0.0, %v777
        %1169 = vrot.lane.b32.xlu0 %v1153, 124
        %v1170 = vpop.permute.xlu0 %1169
        %1171 = vrot.lane.b32.xlu0 %v1154, 124
        %v1172 = vpop.permute.xlu0 %1171
        %1173 = vrot.lane.b32.xlu0 %v1155, 124
        %v1174 = vpop.permute.xlu0 %1173
        %1175 = vrot.lane.b32.xlu0 %v1156, 124
        %v1176 = vpop.permute.xlu0 %1175
        %1177 = vrot.lane.b32.xlu0 %v1157, 124
        %v1178 = vpop.permute.xlu0 %1177
        %1179 = vrot.lane.b32.xlu0 %v1158, 124
        %v1180 = vpop.permute.xlu0 %1179
        %1181 = vrot.lane.b32.xlu0 %v1159, 124
        %v1182 = vpop.permute.xlu0 %1181
        %1183 = vrot.lane.b32.xlu0 %v1160, 124
        %v1184 = vpop.permute.xlu0 %1183
        %1201 = vrot.lane.b32.xlu0 %v750, 4
        %v1202 = vpop.permute.xlu0 %1201
        %1203 = vrot.lane.b32.xlu0 %v774, 4
        %v1204 = vpop.permute.xlu0 %1203
        %1205 = vrot.lane.b32.xlu0 %v757, 4
        %v1206 = vpop.permute.xlu0 %1205
        %1207 = vrot.lane.b32.xlu0 %v775, 4
        %v1208 = vpop.permute.xlu0 %1207
        %1209 = vrot.lane.b32.xlu0 %v766, 4
        %v1210 = vpop.permute.xlu0 %1209
        %1211 = vrot.lane.b32.xlu0 %v776, 4
        %v1212 = vpop.permute.xlu0 %1211
        %1213 = vrot.lane.b32.xlu0 %v773, 4
        %v1214 = vpop.permute.xlu0 %1213
        %1215 = vrot.lane.b32.xlu0 %v777, 4
        %v1216 = vpop.permute.xlu0 %1215
        %v1225 = vsel %vm1080, %v1170, %v1202
        %v1226 = vsel %vm1080, %v1172, %v1204
        %v1227 = vsel %vm1080, %v1174, %v1206
        %v1228 = vsel %vm1080, %v1176, %v1208
        %v1229 = vsel %vm1080, %v1178, %v1210
        %v1230 = vsel %vm1080, %v1180, %v1212
        %v1231 = vsel %vm1080, %v1182, %v1214
        %v1232 = vsel %vm1080, %v1184, %v1216
        %v1233 = vmul.f32 %v1225, %v1092
        %v1234 = vmul.f32 %v1226, %v1096
        %v1235 = vmul.f32 %v1227, %v1100
        %v1236 = vmul.f32 %v1228, %v1104
        %v1237 = vmul.f32 %v1229, %v1108
        %v1238 = vmul.f32 %v1230, %v1112
        %v1239 = vmul.f32 %v1231, %v1116
        %v1240 = vmul.f32 %v1232, %v1120
        %v1241 = vadd.f32 %v1145, %v1233
        %v1242 = vadd.f32 %v1146, %v1234
        %v1243 = vadd.f32 %v1147, %v1235
        %v1244 = vadd.f32 %v1148, %v1236
        %v1245 = vadd.f32 %v1149, %v1237
        %v1246 = vadd.f32 %v1150, %v1238
        %v1247 = vadd.f32 %v1151, %v1239
        %v1248 = vadd.f32 %v1152, %v1240
        %v1258 = vunpack.c.l.s4 1966171168
        %v1259 = vunpack.c.0.s8 %v1258
        %v1260 = vlaneseq
        %v1261 = vshrl.u32 %v1260, 7
        %v1262 = vsub.s32 %v1259, %v1261
        %v1263 = vrot.slane %v1137, %v1262
        %v1264 = vcombine.high %v1263, %v1263
        %v1266 = vunpack.c.l.s4 1966171168
        %v1267 = vunpack.c.0.s8 %v1266
        %v1268 = vlaneseq
        %v1269 = vshrl.u32 %v1268, 7
        %v1270 = vsub.s32 %v1267, %v1269
        %v1271 = vrot.slane %v1263, %v1270
        %v1273 = vunpack.c.l.s4 1966171168
        %v1274 = vunpack.c.0.s8 %v1273
        %v1275 = vlaneseq
        %v1276 = vshrl.u32 %v1275, 7
        %v1277 = vsub.s32 %v1274, %v1276
        %v1278 = vrot.slane %v1264, %v1277
        %v1280 = vunpack.c.l.s4 1966171168
        %v1281 = vunpack.c.0.s8 %v1280
        %v1282 = vlaneseq
        %v1283 = vshrl.u32 %v1282, 7
        %v1284 = vsub.s32 %v1281, %v1283
        %v1285 = vrot.slane %v1138, %v1284
        %v1286 = vcombine.high %v1285, %v1285
        %v1288 = vunpack.c.l.s4 1966171168
        %v1289 = vunpack.c.0.s8 %v1288
        %v1290 = vlaneseq
        %v1291 = vshrl.u32 %v1290, 7
        %v1292 = vsub.s32 %v1289, %v1291
        %v1293 = vrot.slane %v1285, %v1292
        %v1295 = vunpack.c.l.s4 1966171168
        %v1296 = vunpack.c.0.s8 %v1295
        %v1297 = vlaneseq
        %v1298 = vshrl.u32 %v1297, 7
        %v1299 = vsub.s32 %v1296, %v1298
        %v1300 = vrot.slane %v1286, %v1299
        %v1302 = vunpack.c.l.s4 1966171168
        %v1303 = vunpack.c.0.s8 %v1302
        %v1304 = vlaneseq
        %v1305 = vshrl.u32 %v1304, 7
        %v1306 = vsub.s32 %v1303, %v1305
        %v1307 = vrot.slane %v1139, %v1306
        %v1308 = vcombine.high %v1307, %v1307
        %v1310 = vunpack.c.l.s4 1966171168
        %v1311 = vunpack.c.0.s8 %v1310
        %v1312 = vlaneseq
        %v1313 = vshrl.u32 %v1312, 7
        %v1314 = vsub.s32 %v1311, %v1313
        %v1315 = vrot.slane %v1307, %v1314
        %v1317 = vunpack.c.l.s4 1966171168
        %v1318 = vunpack.c.0.s8 %v1317
        %v1319 = vlaneseq
        %v1320 = vshrl.u32 %v1319, 7
        %v1321 = vsub.s32 %v1318, %v1320
        %v1322 = vrot.slane %v1308, %v1321
        %v1324 = vunpack.c.l.s4 1966171168
        %v1325 = vunpack.c.0.s8 %v1324
        %v1326 = vlaneseq
        %v1327 = vshrl.u32 %v1326, 7
        %v1328 = vsub.s32 %v1325, %v1327
        %v1329 = vrot.slane %v1140, %v1328
        %v1330 = vcombine.high %v1329, %v1329
        %v1332 = vunpack.c.l.s4 1966171168
        %v1333 = vunpack.c.0.s8 %v1332
        %v1334 = vlaneseq
        %v1335 = vshrl.u32 %v1334, 7
        %v1336 = vsub.s32 %v1333, %v1335
        %v1337 = vrot.slane %v1329, %v1336
        %v1339 = vunpack.c.l.s4 1966171168
        %v1340 = vunpack.c.0.s8 %v1339
        %v1341 = vlaneseq
        %v1342 = vshrl.u32 %v1341, 7
        %v1343 = vsub.s32 %v1340, %v1342
        %v1344 = vrot.slane %v1330, %v1343
        %v1346 = vunpack.c.l.s4 1966171168
        %v1347 = vunpack.c.0.s8 %v1346
        %v1348 = vlaneseq
        %v1349 = vshrl.u32 %v1348, 7
        %v1350 = vsub.s32 %v1347, %v1349
        %v1351 = vrot.slane %v1141, %v1350
        %v1352 = vcombine.high %v1351, %v1351
        %v1354 = vunpack.c.l.s4 1966171168
        %v1355 = vunpack.c.0.s8 %v1354
        %v1356 = vlaneseq
        %v1357 = vshrl.u32 %v1356, 7
        %v1358 = vsub.s32 %v1355, %v1357
        %v1359 = vrot.slane %v1351, %v1358
        %v1361 = vunpack.c.l.s4 1966171168
        %v1362 = vunpack.c.0.s8 %v1361
        %v1363 = vlaneseq
        %v1364 = vshrl.u32 %v1363, 7
        %v1365 = vsub.s32 %v1362, %v1364
        %v1366 = vrot.slane %v1352, %v1365
        %v1368 = vunpack.c.l.s4 1966171168
        %v1369 = vunpack.c.0.s8 %v1368
        %v1370 = vlaneseq
        %v1371 = vshrl.u32 %v1370, 7
        %v1372 = vsub.s32 %v1369, %v1371
        %v1373 = vrot.slane %v1142, %v1372
        %v1374 = vcombine.high %v1373, %v1373
        %v1376 = vunpack.c.l.s4 1966171168
        %v1377 = vunpack.c.0.s8 %v1376
        %v1378 = vlaneseq
        %v1379 = vshrl.u32 %v1378, 7
        %v1380 = vsub.s32 %v1377, %v1379
        %v1381 = vrot.slane %v1373, %v1380
        %v1383 = vunpack.c.l.s4 1966171168
        %v1384 = vunpack.c.0.s8 %v1383
        %v1385 = vlaneseq
        %v1386 = vshrl.u32 %v1385, 7
        %v1387 = vsub.s32 %v1384, %v1386
        %v1388 = vrot.slane %v1374, %v1387
        %v1390 = vunpack.c.l.s4 1966171168
        %v1391 = vunpack.c.0.s8 %v1390
        %v1392 = vlaneseq
        %v1393 = vshrl.u32 %v1392, 7
        %v1394 = vsub.s32 %v1391, %v1393
        %v1395 = vrot.slane %v1143, %v1394
        %v1396 = vcombine.high %v1395, %v1395
        %v1398 = vunpack.c.l.s4 1966171168
        %v1399 = vunpack.c.0.s8 %v1398
        %v1400 = vlaneseq
        %v1401 = vshrl.u32 %v1400, 7
        %v1402 = vsub.s32 %v1399, %v1401
        %v1403 = vrot.slane %v1395, %v1402
        %v1405 = vunpack.c.l.s4 1966171168
        %v1406 = vunpack.c.0.s8 %v1405
        %v1407 = vlaneseq
        %v1408 = vshrl.u32 %v1407, 7
        %v1409 = vsub.s32 %v1406, %v1408
        %v1410 = vrot.slane %v1396, %v1409
        %v1412 = vunpack.c.l.s4 1966171168
        %v1413 = vunpack.c.0.s8 %v1412
        %v1414 = vlaneseq
        %v1415 = vshrl.u32 %v1414, 7
        %v1416 = vsub.s32 %v1413, %v1415
        %v1417 = vrot.slane %v1144, %v1416
        %v1418 = vcombine.high %v1417, %v1417
        %v1420 = vunpack.c.l.s4 1966171168
        %v1421 = vunpack.c.0.s8 %v1420
        %v1422 = vlaneseq
        %v1423 = vshrl.u32 %v1422, 7
        %v1424 = vsub.s32 %v1421, %v1423
        %v1425 = vrot.slane %v1417, %v1424
        %v1427 = vunpack.c.l.s4 1966171168
        %v1428 = vunpack.c.0.s8 %v1427
        %v1429 = vlaneseq
        %v1430 = vshrl.u32 %v1429, 7
        %v1431 = vsub.s32 %v1428, %v1430
        %v1432 = vrot.slane %v1418, %v1431
        %v1433 = vlaneseq
        %v1434 = vshrl.u32 %v1433, 7
        %v1435 = vsub.s32 0, %v1434
        %v1436 = vrot.slane %v1271, %v1435
        %v1437 = vlaneseq
        %v1438 = vshrl.u32 %v1437, 7
        %v1439 = vsub.s32 0, %v1438
        %v1440 = vrot.slane %v1278, %v1439
        %v1441 = vlaneseq
        %v1442 = vshrl.u32 %v1441, 7
        %v1443 = vsub.s32 0, %v1442
        %v1444 = vrot.slane %v1293, %v1443
        %v1445 = vlaneseq
        %v1446 = vshrl.u32 %v1445, 7
        %v1447 = vsub.s32 0, %v1446
        %v1448 = vrot.slane %v1300, %v1447
        %v1449 = vlaneseq
        %v1450 = vshrl.u32 %v1449, 7
        %v1451 = vsub.s32 0, %v1450
        %v1452 = vrot.slane %v1315, %v1451
        %v1453 = vlaneseq
        %v1454 = vshrl.u32 %v1453, 7
        %v1455 = vsub.s32 0, %v1454
        %v1456 = vrot.slane %v1322, %v1455
        %v1457 = vlaneseq
        %v1458 = vshrl.u32 %v1457, 7
        %v1459 = vsub.s32 0, %v1458
        %v1460 = vrot.slane %v1337, %v1459
        %v1461 = vlaneseq
        %v1462 = vshrl.u32 %v1461, 7
        %v1463 = vsub.s32 0, %v1462
        %v1464 = vrot.slane %v1344, %v1463
        %v1465 = vlaneseq
        %v1466 = vshrl.u32 %v1465, 7
        %v1467 = vsub.s32 0, %v1466
        %v1468 = vrot.slane %v1359, %v1467
        %v1469 = vlaneseq
        %v1470 = vshrl.u32 %v1469, 7
        %v1471 = vsub.s32 0, %v1470
        %v1472 = vrot.slane %v1366, %v1471
        %v1473 = vlaneseq
        %v1474 = vshrl.u32 %v1473, 7
        %v1475 = vsub.s32 0, %v1474
        %v1476 = vrot.slane %v1381, %v1475
        %v1477 = vlaneseq
        %v1478 = vshrl.u32 %v1477, 7
        %v1479 = vsub.s32 0, %v1478
        %v1480 = vrot.slane %v1388, %v1479
        %v1481 = vlaneseq
        %v1482 = vshrl.u32 %v1481, 7
        %v1483 = vsub.s32 0, %v1482
        %v1484 = vrot.slane %v1403, %v1483
        %v1485 = vlaneseq
        %v1486 = vshrl.u32 %v1485, 7
        %v1487 = vsub.s32 0, %v1486
        %v1488 = vrot.slane %v1410, %v1487
        %v1489 = vlaneseq
        %v1490 = vshrl.u32 %v1489, 7
        %v1491 = vsub.s32 0, %v1490
        %v1492 = vrot.slane %v1425, %v1491
        %v1493 = vlaneseq
        %v1494 = vshrl.u32 %v1493, 7
        %v1495 = vsub.s32 0, %v1494
        %v1496 = vrot.slane %v1432, %v1495
        %v1513 = vmul.f32 %v1436, 0.35355338
        %v1514 = vmul.f32 %v1440, 0.35355338
        %v1515 = vmul.f32 %v1444, 0.35355338
        %v1516 = vmul.f32 %v1448, 0.35355338
        %v1517 = vmul.f32 %v1452, 0.35355338
        %v1518 = vmul.f32 %v1456, 0.35355338
        %v1519 = vmul.f32 %v1460, 0.35355338
        %v1520 = vmul.f32 %v1464, 0.35355338
        %v1521 = vmul.f32 %v1468, 0.35355338
        %v1522 = vmul.f32 %v1472, 0.35355338
        %v1523 = vmul.f32 %v1476, 0.35355338
        %v1524 = vmul.f32 %v1480, 0.35355338
        %v1525 = vmul.f32 %v1484, 0.35355338
        %v1526 = vmul.f32 %v1488, 0.35355338
        %v1527 = vmul.f32 %v1492, 0.35355338
        %v1528 = vmul.f32 %v1496, 0.35355338
        %v1529 = vcombine.low %v1513, %v1515
        %v1531 = vunpack.c.l.s4 1934713408
        %v1532 = vunpack.c.0.s8 %v1531
        %v1533 = vlaneseq
        %v1534 = vshrl.u32 %v1533, 7
        %v1535 = vsub.s32 %v1532, %v1534
        %v1536 = vrot.slane %v1529, %v1535
        %v1537 = vcombine.high %v1536, 0.0
        %v1538 = vcombine.low %v1517, %v1519
        %v1540 = vunpack.c.l.s4 1934713408
        %v1541 = vunpack.c.0.s8 %v1540
        %v1542 = vlaneseq
        %v1543 = vshrl.u32 %v1542, 7
        %v1544 = vsub.s32 %v1541, %v1543
        %v1545 = vrot.slane %v1538, %v1544
        %v1546 = vcombine.high %v1545, 0.0
        %v1547 = vcombine.low %v1521, %v1523
        %v1549 = vunpack.c.l.s4 1934713408
        %v1550 = vunpack.c.0.s8 %v1549
        %v1551 = vlaneseq
        %v1552 = vshrl.u32 %v1551, 7
        %v1553 = vsub.s32 %v1550, %v1552
        %v1554 = vrot.slane %v1547, %v1553
        %v1555 = vcombine.high %v1554, 0.0
        %v1556 = vcombine.low %v1525, %v1527
        %v1558 = vunpack.c.l.s4 1934713408
        %v1559 = vunpack.c.0.s8 %v1558
        %v1560 = vlaneseq
        %v1561 = vshrl.u32 %v1560, 7
        %v1562 = vsub.s32 %v1559, %v1561
        %v1563 = vrot.slane %v1556, %v1562
        %v1564 = vcombine.high %v1563, 0.0
        %v1565 = vcombine.low %v1514, %v1516
        %v1567 = vunpack.c.l.s4 1934713408
        %v1568 = vunpack.c.0.s8 %v1567
        %v1569 = vlaneseq
        %v1570 = vshrl.u32 %v1569, 7
        %v1571 = vsub.s32 %v1568, %v1570
        %v1572 = vrot.slane %v1565, %v1571
        %v1573 = vcombine.high %v1572, 0.0
        %v1574 = vcombine.low %v1518, %v1520
        %v1576 = vunpack.c.l.s4 1934713408
        %v1577 = vunpack.c.0.s8 %v1576
        %v1578 = vlaneseq
        %v1579 = vshrl.u32 %v1578, 7
        %v1580 = vsub.s32 %v1577, %v1579
        %v1581 = vrot.slane %v1574, %v1580
        %v1582 = vcombine.high %v1581, 0.0
        %v1583 = vcombine.low %v1522, %v1524
        %v1585 = vunpack.c.l.s4 1934713408
        %v1586 = vunpack.c.0.s8 %v1585
        %v1587 = vlaneseq
        %v1588 = vshrl.u32 %v1587, 7
        %v1589 = vsub.s32 %v1586, %v1588
        %v1590 = vrot.slane %v1583, %v1589
        %v1591 = vcombine.high %v1590, 0.0
        %v1592 = vcombine.low %v1526, %v1528
        %v1594 = vunpack.c.l.s4 1934713408
        %v1595 = vunpack.c.0.s8 %v1594
        %v1596 = vlaneseq
        %v1597 = vshrl.u32 %v1596, 7
        %v1598 = vsub.s32 %v1595, %v1597
        %v1599 = vrot.slane %v1592, %v1598
        %v1600 = vcombine.high %v1599, 0.0
        %v1617 = vcombine.low %v1536, %v1545
        %v1618 = vcombine.low %v1554, %v1563
        %v1620 = vunpack.c.l.s4 1983009808
        %v1621 = vunpack.c.0.s8 %v1620
        %v1622 = vlaneseq
        %v1623 = vshrl.u32 %v1622, 7
        %v1624 = vsub.s32 %v1621, %v1623
        %v1625 = vrot.slane %v1617, %v1624
        %v1627 = vunpack.c.l.s4 1983009808
        %v1628 = vunpack.c.0.s8 %v1627
        %v1629 = vlaneseq
        %v1630 = vshrl.u32 %v1629, 7
        %v1631 = vsub.s32 %v1628, %v1630
        %v1632 = vrot.slane %v1618, %v1631
        %v1633 = vcombine.low %v1625, %v1632
        %v1634 = vcombine.low %v1537, %v1546
        %v1635 = vcombine.low %v1555, %v1564
        %v1637 = vunpack.c.l.s4 1983009808
        %v1638 = vunpack.c.0.s8 %v1637
        %v1639 = vlaneseq
        %v1640 = vshrl.u32 %v1639, 7
        %v1641 = vsub.s32 %v1638, %v1640
        %v1642 = vrot.slane %v1634, %v1641
        %v1644 = vunpack.c.l.s4 1983009808
        %v1645 = vunpack.c.0.s8 %v1644
        %v1646 = vlaneseq
        %v1647 = vshrl.u32 %v1646, 7
        %v1648 = vsub.s32 %v1645, %v1647
        %v1649 = vrot.slane %v1635, %v1648
        %v1650 = vcombine.low %v1642, %v1649
        %v1651 = vcombine.low %v1572, %v1581
        %v1652 = vcombine.low %v1590, %v1599
        %v1654 = vunpack.c.l.s4 1983009808
        %v1655 = vunpack.c.0.s8 %v1654
        %v1656 = vlaneseq
        %v1657 = vshrl.u32 %v1656, 7
        %v1658 = vsub.s32 %v1655, %v1657
        %v1659 = vrot.slane %v1651, %v1658
        %v1661 = vunpack.c.l.s4 1983009808
        %v1662 = vunpack.c.0.s8 %v1661
        %v1663 = vlaneseq
        %v1664 = vshrl.u32 %v1663, 7
        %v1665 = vsub.s32 %v1662, %v1664
        %v1666 = vrot.slane %v1652, %v1665
        %v1667 = vcombine.low %v1659, %v1666
        %v1668 = vcombine.low %v1573, %v1582
        %v1669 = vcombine.low %v1591, %v1600
        %v1671 = vunpack.c.l.s4 1983009808
        %v1672 = vunpack.c.0.s8 %v1671
        %v1673 = vlaneseq
        %v1674 = vshrl.u32 %v1673, 7
        %v1675 = vsub.s32 %v1672, %v1674
        %v1676 = vrot.slane %v1668, %v1675
        %v1678 = vunpack.c.l.s4 1983009808
        %v1679 = vunpack.c.0.s8 %v1678
        %v1680 = vlaneseq
        %v1681 = vshrl.u32 %v1680, 7
        %v1682 = vsub.s32 %v1679, %v1681
        %v1683 = vrot.slane %v1669, %v1682
        %v1684 = vcombine.low %v1676, %v1683
        %v1689 = vpack.c.bf16 %v1633, %v1633
        %v1690 = vpack.c.bf16 %v1650, %v1650
        %v1691 = vpack.c.bf16 %v1667, %v1667
        %v1692 = vpack.c.bf16 %v1684, %v1684
        %v1693 = vcombine.low %v1241, %v1243
        %v1695 = vunpack.c.l.s4 1983009808
        %v1696 = vunpack.c.0.s8 %v1695
        %v1697 = vlaneseq
        %v1698 = vshrl.u32 %v1697, 7
        %v1699 = vsub.s32 %v1696, %v1698
        %v1700 = vrot.slane %v1693, %v1699
        %v1701 = vcombine.low %v1242, %v1244
        %v1703 = vunpack.c.l.s4 1983009808
        %v1704 = vunpack.c.0.s8 %v1703
        %v1705 = vlaneseq
        %v1706 = vshrl.u32 %v1705, 7
        %v1707 = vsub.s32 %v1704, %v1706
        %v1708 = vrot.slane %v1701, %v1707
        %v1709 = vcombine.low %v1245, %v1247
        %v1711 = vunpack.c.l.s4 1983009808
        %v1712 = vunpack.c.0.s8 %v1711
        %v1713 = vlaneseq
        %v1714 = vshrl.u32 %v1713, 7
        %v1715 = vsub.s32 %v1712, %v1714
        %v1716 = vrot.slane %v1709, %v1715
        %v1717 = vcombine.low %v1246, %v1248
        %v1719 = vunpack.c.l.s4 1983009808
        %v1720 = vunpack.c.0.s8 %v1719
        %v1721 = vlaneseq
        %v1722 = vshrl.u32 %v1721, 7
        %v1723 = vsub.s32 %v1720, %v1722
        %v1724 = vrot.slane %v1717, %v1723
        %v1725 = vcombine.low %v1700, %v1708
        %v1726 = vcombine.high %v1700, %v1708
        %v1728 = vunpack.c.l.s4 1934713408
        %v1729 = vunpack.c.0.s8 %v1728
        %v1730 = vlaneseq
        %v1731 = vshrl.u32 %v1730, 7
        %v1732 = vsub.s32 %v1729, %v1731
        %v1733 = vrot.slane %v1725, %v1732
        %v1735 = vunpack.c.l.s4 1934713408
        %v1736 = vunpack.c.0.s8 %v1735
        %v1737 = vlaneseq
        %v1738 = vshrl.u32 %v1737, 7
        %v1739 = vsub.s32 %v1736, %v1738
        %v1740 = vrot.slane %v1726, %v1739
        %v1741 = vcombine.low %v1716, %v1724
        %v1742 = vcombine.high %v1716, %v1724
        %v1744 = vunpack.c.l.s4 1934713408
        %v1745 = vunpack.c.0.s8 %v1744
        %v1746 = vlaneseq
        %v1747 = vshrl.u32 %v1746, 7
        %v1748 = vsub.s32 %v1745, %v1747
        %v1749 = vrot.slane %v1741, %v1748
        %v1751 = vunpack.c.l.s4 1934713408
        %v1752 = vunpack.c.0.s8 %v1751
        %v1753 = vlaneseq
        %v1754 = vshrl.u32 %v1753, 7
        %v1755 = vsub.s32 %v1752, %v1754
        %v1756 = vrot.slane %v1742, %v1755
        %v1757 = vcombine.low %v1733, %v1749
        %v1758 = vcombine.high %v1733, %v1749
        %v1759 = vcombine.low %v1740, %v1756
        %v1760 = vcombine.high %v1740, %v1756
        %v1761 = vpack.c.bf16 %v1757, %v1757
        %v1762 = vpack.c.bf16 %v1758, %v1758
        %v1763 = vpack.c.bf16 %v1759, %v1759
        %v1764 = vpack.c.bf16 %v1760, %v1760
        %v1765 = vcombine.low %v830, %v837
        %v1767 = vunpack.c.l.s4 1983009808
        %v1768 = vunpack.c.0.s8 %v1767
        %v1769 = vlaneseq
        %v1770 = vshrl.u32 %v1769, 7
        %v1771 = vsub.s32 %v1768, %v1770
        %v1772 = vrot.slane %v1765, %v1771
        %v1773 = vcombine.low %v854, %v855
        %v1775 = vunpack.c.l.s4 1983009808
        %v1776 = vunpack.c.0.s8 %v1775
        %v1777 = vlaneseq
        %v1778 = vshrl.u32 %v1777, 7
        %v1779 = vsub.s32 %v1776, %v1778
        %v1780 = vrot.slane %v1773, %v1779
        %v1781 = vcombine.low %v846, %v853
        %v1783 = vunpack.c.l.s4 1983009808
        %v1784 = vunpack.c.0.s8 %v1783
        %v1785 = vlaneseq
        %v1786 = vshrl.u32 %v1785, 7
        %v1787 = vsub.s32 %v1784, %v1786
        %v1788 = vrot.slane %v1781, %v1787
        %v1789 = vcombine.low %v856, %v857
        %v1791 = vunpack.c.l.s4 1983009808
        %v1792 = vunpack.c.0.s8 %v1791
        %v1793 = vlaneseq
        %v1794 = vshrl.u32 %v1793, 7
        %v1795 = vsub.s32 %v1792, %v1794
        %v1796 = vrot.slane %v1789, %v1795
        %v1797 = vcombine.low %v1772, %v1780
        %v1798 = vcombine.high %v1772, %v1780
        %v1800 = vunpack.c.l.s4 1934713408
        %v1801 = vunpack.c.0.s8 %v1800
        %v1802 = vlaneseq
        %v1803 = vshrl.u32 %v1802, 7
        %v1804 = vsub.s32 %v1801, %v1803
        %v1805 = vrot.slane %v1797, %v1804
        %v1807 = vunpack.c.l.s4 1934713408
        %v1808 = vunpack.c.0.s8 %v1807
        %v1809 = vlaneseq
        %v1810 = vshrl.u32 %v1809, 7
        %v1811 = vsub.s32 %v1808, %v1810
        %v1812 = vrot.slane %v1798, %v1811
        %v1813 = vcombine.low %v1788, %v1796
        %v1814 = vcombine.high %v1788, %v1796
        %v1816 = vunpack.c.l.s4 1934713408
        %v1817 = vunpack.c.0.s8 %v1816
        %v1818 = vlaneseq
        %v1819 = vshrl.u32 %v1818, 7
        %v1820 = vsub.s32 %v1817, %v1819
        %v1821 = vrot.slane %v1813, %v1820
        %v1823 = vunpack.c.l.s4 1934713408
        %v1824 = vunpack.c.0.s8 %v1823
        %v1825 = vlaneseq
        %v1826 = vshrl.u32 %v1825, 7
        %v1827 = vsub.s32 %v1824, %v1826
        %v1828 = vrot.slane %v1814, %v1827
        %v1829 = vcombine.low %v1805, %v1821
        %v1830 = vcombine.high %v1805, %v1821
        %v1831 = vcombine.low %v1812, %v1828
        %v1832 = vcombine.high %v1812, %v1828
        %v1833 = vpack.c.bf16 %v1829, %v1829
        %v1834 = vpack.c.bf16 %v1830, %v1830
        %v1835 = vpack.c.bf16 %v1831, %v1831
        %v1836 = vpack.c.bf16 %v1832, %v1832
        %vm1837 = vcmask 64512
        %v1839 = vsel %vm1837, %v1689, 0
        %v1842 = vsel %vm1837, %v1761, 0
        %1844 = vmatprep.subr.bf16.mxu0 0
        %1845 = vmatpush1.bf16.xpose.msra.mxu0 0
        %1846 = vmatprep.subr.bf16.mxu0 0
        %1847 = vmatpush1.bf16.xpose.msra.mxu0 0
        %1848 = vmatprep.subr.bf16.mxu0 0
        %1849 = vmatpush1.bf16.xpose.msra.mxu0 0
        %1850 = vmatprep.subr.bf16.mxu0 0
        %1851 = vmatpush1.bf16.xpose.msra.mxu0 0
        %1852 = vmatprep.subr.bf16.mxu0 0
        %1853 = vmatpush1.bf16.xpose.msra.mxu0 0
        %1854 = vmatprep.subr.bf16.mxu0 0
        %1855 = vmatpush1.bf16.xpose.msra.mxu0 0
        %1856 = vmatprep.subr.bf16.mxu0 0
        %1857 = vmatpush1.bf16.xpose.msra.mxu0 0
        %1858 = vmatprep.subr.bf16.mxu0 0
        %1859 = vmatpush1.bf16.xpose.msra.mxu0 %v1842
        %1860 = vmatprep.subr.bf16.mxu0 0
        %1861 = vmatpush2.bf16.xpose.msra.mxu0 0
        %1862 = vmatprep.subr.bf16.mxu0 0
        %1863 = vmatpush2.bf16.xpose.msra.mxu0 0
        %1864 = vmatprep.subr.bf16.mxu0 0
        %1865 = vmatpush2.bf16.xpose.msra.mxu0 0
        %1866 = vmatprep.subr.bf16.mxu0 0
        %1867 = vmatpush2.bf16.xpose.msra.mxu0 0
        %1868 = vmatprep.subr.bf16.mxu0 0
        %1869 = vmatpush2.bf16.xpose.msra.mxu0 0
        %1870 = vmatprep.subr.bf16.mxu0 0
        %1871 = vmatpush2.bf16.xpose.msra.mxu0 0
        %1872 = vmatprep.subr.bf16.mxu0 0
        %1873 = vmatpush2.bf16.xpose.msra.mxu0 0
        %1874 = vmatprep.subr.bf16.mxu0 0
        %1875 = vmatpush2.bf16.xpose.msra.mxu0 0
        %1876 = vmatprep.mubr.bf16.mxu0 0
        %1877 = vmatmul.mubr.bf16.gmra.mxu0 %v1839
        %v1878 = vpop.f32.mrf.mxu0
        %v1879 = vadd.f32 0.0, %v1878
        %v1880 = vpop.f32.mrf.mxu0
        %v1881 = vpop.f32.mrf.mxu0
        %v1882 = vpop.f32.mrf.mxu0
        %1883 = vdwg.mxu0
        %v1885 = vsel %vm1837, %v1690, 0
        %v1888 = vsel %vm1837, %v1762, 0
        %1890 = vmatprep.subr.bf16.mxu0 0
        %1891 = vmatpush1.bf16.xpose.msra.mxu0 0
        %1892 = vmatprep.subr.bf16.mxu0 0
        %1893 = vmatpush1.bf16.xpose.msra.mxu0 0
        %1894 = vmatprep.subr.bf16.mxu0 0
        %1895 = vmatpush1.bf16.xpose.msra.mxu0 0
        %1896 = vmatprep.subr.bf16.mxu0 0
        %1897 = vmatpush1.bf16.xpose.msra.mxu0 0
        %1898 = vmatprep.subr.bf16.mxu0 0
        %1899 = vmatpush1.bf16.xpose.msra.mxu0 0
        %1900 = vmatprep.subr.bf16.mxu0 0
        %1901 = vmatpush1.bf16.xpose.msra.mxu0 0
        %1902 = vmatprep.subr.bf16.mxu0 0
        %1903 = vmatpush1.bf16.xpose.msra.mxu0 0
        %1904 = vmatprep.subr.bf16.mxu0 0
        %1905 = vmatpush1.bf16.xpose.msra.mxu0 %v1888
        %1906 = vmatprep.subr.bf16.mxu0 0
        %1907 = vmatpush2.bf16.xpose.msra.mxu0 0
        %1908 = vmatprep.subr.bf16.mxu0 0
        %1909 = vmatpush2.bf16.xpose.msra.mxu0 0
        %1910 = vmatprep.subr.bf16.mxu0 0
        %1911 = vmatpush2.bf16.xpose.msra.mxu0 0
        %1912 = vmatprep.subr.bf16.mxu0 0
        %1913 = vmatpush2.bf16.xpose.msra.mxu0 0
        %1914 = vmatprep.subr.bf16.mxu0 0
        %1915 = vmatpush2.bf16.xpose.msra.mxu0 0
        %1916 = vmatprep.subr.bf16.mxu0 0
        %1917 = vmatpush2.bf16.xpose.msra.mxu0 0
        %1918 = vmatprep.subr.bf16.mxu0 0
        %1919 = vmatpush2.bf16.xpose.msra.mxu0 0
        %1920 = vmatprep.subr.bf16.mxu0 0
        %1921 = vmatpush2.bf16.xpose.msra.mxu0 0
        %1922 = vmatprep.mubr.bf16.mxu0 0
        %1923 = vmatmul.mubr.bf16.gmra.mxu0 %v1885
        %v1924 = vpop.f32.mrf.mxu0
        %v1925 = vadd.f32 0.0, %v1924
        %v1926 = vpop.f32.mrf.mxu0
        %v1927 = vpop.f32.mrf.mxu0
        %v1928 = vpop.f32.mrf.mxu0
        %1929 = vdwg.mxu0
        %v1931 = vsel %vm1837, %v1691, 0
        %v1934 = vsel %vm1837, %v1763, 0
        %1936 = vmatprep.subr.bf16.mxu0 0
        %1937 = vmatpush1.bf16.xpose.msra.mxu0 0
        %1938 = vmatprep.subr.bf16.mxu0 0
        %1939 = vmatpush1.bf16.xpose.msra.mxu0 0
        %1940 = vmatprep.subr.bf16.mxu0 0
        %1941 = vmatpush1.bf16.xpose.msra.mxu0 0
        %1942 = vmatprep.subr.bf16.mxu0 0
        %1943 = vmatpush1.bf16.xpose.msra.mxu0 0
        %1944 = vmatprep.subr.bf16.mxu0 0
        %1945 = vmatpush1.bf16.xpose.msra.mxu0 0
        %1946 = vmatprep.subr.bf16.mxu0 0
        %1947 = vmatpush1.bf16.xpose.msra.mxu0 0
        %1948 = vmatprep.subr.bf16.mxu0 0
        %1949 = vmatpush1.bf16.xpose.msra.mxu0 0
        %1950 = vmatprep.subr.bf16.mxu0 0
        %1951 = vmatpush1.bf16.xpose.msra.mxu0 %v1934
        %1952 = vmatprep.subr.bf16.mxu0 0
        %1953 = vmatpush2.bf16.xpose.msra.mxu0 0
        %1954 = vmatprep.subr.bf16.mxu0 0
        %1955 = vmatpush2.bf16.xpose.msra.mxu0 0
        %1956 = vmatprep.subr.bf16.mxu0 0
        %1957 = vmatpush2.bf16.xpose.msra.mxu0 0
        %1958 = vmatprep.subr.bf16.mxu0 0
        %1959 = vmatpush2.bf16.xpose.msra.mxu0 0
        %1960 = vmatprep.subr.bf16.mxu0 0
        %1961 = vmatpush2.bf16.xpose.msra.mxu0 0
        %1962 = vmatprep.subr.bf16.mxu0 0
        %1963 = vmatpush2.bf16.xpose.msra.mxu0 0
        %1964 = vmatprep.subr.bf16.mxu0 0
        %1965 = vmatpush2.bf16.xpose.msra.mxu0 0
        %1966 = vmatprep.subr.bf16.mxu0 0
        %1967 = vmatpush2.bf16.xpose.msra.mxu0 0
        %1968 = vmatprep.mubr.bf16.mxu0 0
        %1969 = vmatmul.mubr.bf16.gmra.mxu0 %v1931
        %v1970 = vpop.f32.mrf.mxu0
        %v1971 = vadd.f32 0.0, %v1970
        %v1972 = vpop.f32.mrf.mxu0
        %v1973 = vpop.f32.mrf.mxu0
        %v1974 = vpop.f32.mrf.mxu0
        %1975 = vdwg.mxu0
        %v1977 = vsel %vm1837, %v1692, 0
        %v1980 = vsel %vm1837, %v1764, 0
        %1982 = vmatprep.subr.bf16.mxu0 0
        %1983 = vmatpush1.bf16.xpose.msra.mxu0 0
        %1984 = vmatprep.subr.bf16.mxu0 0
        %1985 = vmatpush1.bf16.xpose.msra.mxu0 0
        %1986 = vmatprep.subr.bf16.mxu0 0
        %1987 = vmatpush1.bf16.xpose.msra.mxu0 0
        %1988 = vmatprep.subr.bf16.mxu0 0
        %1989 = vmatpush1.bf16.xpose.msra.mxu0 0
        %1990 = vmatprep.subr.bf16.mxu0 0
        %1991 = vmatpush1.bf16.xpose.msra.mxu0 0
        %1992 = vmatprep.subr.bf16.mxu0 0
        %1993 = vmatpush1.bf16.xpose.msra.mxu0 0
        %1994 = vmatprep.subr.bf16.mxu0 0
        %1995 = vmatpush1.bf16.xpose.msra.mxu0 0
        %1996 = vmatprep.subr.bf16.mxu0 0
        %1997 = vmatpush1.bf16.xpose.msra.mxu0 %v1980
        %1998 = vmatprep.subr.bf16.mxu0 0
        %1999 = vmatpush2.bf16.xpose.msra.mxu0 0
        %2000 = vmatprep.subr.bf16.mxu0 0
        %2001 = vmatpush2.bf16.xpose.msra.mxu0 0
        %2002 = vmatprep.subr.bf16.mxu0 0
        %2003 = vmatpush2.bf16.xpose.msra.mxu0 0
        %2004 = vmatprep.subr.bf16.mxu0 0
        %2005 = vmatpush2.bf16.xpose.msra.mxu0 0
        %2006 = vmatprep.subr.bf16.mxu0 0
        %2007 = vmatpush2.bf16.xpose.msra.mxu0 0
        %2008 = vmatprep.subr.bf16.mxu0 0
        %2009 = vmatpush2.bf16.xpose.msra.mxu0 0
        %2010 = vmatprep.subr.bf16.mxu0 0
        %2011 = vmatpush2.bf16.xpose.msra.mxu0 0
        %2012 = vmatprep.subr.bf16.mxu0 0
        %2013 = vmatpush2.bf16.xpose.msra.mxu0 0
        %2014 = vmatprep.mubr.bf16.mxu0 0
        %2015 = vmatmul.mubr.bf16.gmra.mxu0 %v1977
        %v2016 = vpop.f32.mrf.mxu0
        %v2017 = vadd.f32 0.0, %v2016
        %v2018 = vpop.f32.mrf.mxu0
        %v2019 = vpop.f32.mrf.mxu0
        %v2020 = vpop.f32.mrf.mxu0
        %2021 = vdwg.mxu0
        %v2022 = vlaneseq
        %v2023 = vshrl.u32 %v2022, 7
        %v2024 = vlaneseq
        %v2025 = vand.u32 %v2024, 127
        %vm2026 = vcmp.ge.s32.totalorder %v2023, %v2025
        %v2027 = vsel %vm2026, 1, 0
        %vm2028 = vcmp.eq.s32.totalorder %v2027, 1
        %v2029 = vsel %vm2028, %v1879, -1e+10
        %v2030 = vsel %vm2028, %v1925, -1e+10
        %v2031 = vsel %vm2028, %v1971, -1e+10
        %v2032 = vsel %vm2028, %v2017, -1e+10
        %v2033 = vsel %vm1837, %v2029, -inf
        %2034 = vmax.xlane.f32.xlu0 %v2033
        %v2035 = vpop.xlane.xlu0 %2034
        %v2036 = vsel %vm1837, %v2030, -inf
        %2037 = vmax.xlane.f32.xlu0 %v2036
        %v2038 = vpop.xlane.xlu0 %2037
        %v2039 = vsel %vm1837, %v2031, -inf
        %2040 = vmax.xlane.f32.xlu0 %v2039
        %v2041 = vpop.xlane.xlu0 %2040
        %v2042 = vsel %vm1837, %v2032, -inf
        %2043 = vmax.xlane.f32.xlu0 %v2042
        %v2044 = vpop.xlane.xlu0 %2043
        %v2045 = vsub.f32 %v2029, %v2035
        %v2046 = vsub.f32 %v2030, %v2038
        %v2047 = vsub.f32 %v2031, %v2041
        %v2048 = vsub.f32 %v2032, %v2044
        %v2049 = vmul.f32 %v2045, 1.442695
        %v2050 = vpow.pop %v2049
        %v2051 = vmul.f32 %v2046, 1.442695
        %v2052 = vpow.pop %v2051
        %v2053 = vmul.f32 %v2047, 1.442695
        %v2054 = vpow.pop %v2053
        %v2055 = vmul.f32 %v2048, 1.442695
        %v2056 = vpow.pop %v2055
        %v2057 = vsel %vm1837, %v2050, 0.0
        %2058 = vadd.xlane.f32.xlu0 %v2057
        %v2059 = vpop.xlane.xlu0 %2058
        %v2060 = vsel %vm1837, %v2052, 0.0
        %2061 = vadd.xlane.f32.xlu0 %v2060
        %v2062 = vpop.xlane.xlu0 %2061
        %v2063 = vsel %vm1837, %v2054, 0.0
        %2064 = vadd.xlane.f32.xlu0 %v2063
        %v2065 = vpop.xlane.xlu0 %2064
        %v2066 = vsel %vm1837, %v2056, 0.0
        %2067 = vadd.xlane.f32.xlu0 %v2066
        %v2068 = vpop.xlane.xlu0 %2067
        %v2069 = vpack.c.bf16 %v2050, %v2050
        %v2070 = vpack.c.bf16 %v2052, %v2052
        %v2071 = vpack.c.bf16 %v2054, %v2054
        %v2072 = vpack.c.bf16 %v2056, %v2056
        %v2074 = vsel %vm1837, %v2069, 0
        %vm2076 = vcmask 1043456
        %v2078 = vsel %vm2076, %v1833, 0
        %2080 = vmatprep.subr.bf16.mxu0 0
        %2081 = vmatpush1.bf16.msra.mxu0 0
        %2082 = vmatprep.subr.bf16.mxu0 0
        %2083 = vmatpush1.bf16.msra.mxu0 0
        %2084 = vmatprep.subr.bf16.mxu0 0
        %2085 = vmatpush1.bf16.msra.mxu0 0
        %2086 = vmatprep.subr.bf16.mxu0 0
        %2087 = vmatpush1.bf16.msra.mxu0 0
        %2088 = vmatprep.subr.bf16.mxu0 0
        %2089 = vmatpush1.bf16.msra.mxu0 0
        %2090 = vmatprep.subr.bf16.mxu0 0
        %2091 = vmatpush1.bf16.msra.mxu0 0
        %2092 = vmatprep.subr.bf16.mxu0 0
        %2093 = vmatpush1.bf16.msra.mxu0 0
        %2094 = vmatprep.subr.bf16.mxu0 0
        %2095 = vmatpush1.bf16.msra.mxu0 %v2078
        %2096 = vmatprep.subr.bf16.mxu0 0
        %2097 = vmatpush2.bf16.msra.mxu0 0
        %2098 = vmatprep.subr.bf16.mxu0 0
        %2099 = vmatpush2.bf16.msra.mxu0 0
        %2100 = vmatprep.subr.bf16.mxu0 0
        %2101 = vmatpush2.bf16.msra.mxu0 0
        %2102 = vmatprep.subr.bf16.mxu0 0
        %2103 = vmatpush2.bf16.msra.mxu0 0
        %2104 = vmatprep.subr.bf16.mxu0 0
        %2105 = vmatpush2.bf16.msra.mxu0 0
        %2106 = vmatprep.subr.bf16.mxu0 0
        %2107 = vmatpush2.bf16.msra.mxu0 0
        %2108 = vmatprep.subr.bf16.mxu0 0
        %2109 = vmatpush2.bf16.msra.mxu0 0
        %2110 = vmatprep.subr.bf16.mxu0 0
        %2111 = vmatpush2.bf16.msra.mxu0 0
        %2112 = vmatprep.mubr.bf16.mxu0 0
        %2113 = vmatmul.mubr.bf16.gmra.mxu0 %v2074
        %v2114 = vpop.f32.mrf.mxu0
        %v2115 = vadd.f32 0.0, %v2114
        %v2116 = vpop.f32.mrf.mxu0
        %v2117 = vpop.f32.mrf.mxu0
        %v2118 = vpop.f32.mrf.mxu0
        %2119 = vdwg.mxu0
        %v2121 = vsel %vm1837, %v2070, 0
        %v2124 = vsel %vm2076, %v1834, 0
        %2126 = vmatprep.subr.bf16.mxu0 0
        %2127 = vmatpush1.bf16.msra.mxu0 0
        %2128 = vmatprep.subr.bf16.mxu0 0
        %2129 = vmatpush1.bf16.msra.mxu0 0
        %2130 = vmatprep.subr.bf16.mxu0 0
        %2131 = vmatpush1.bf16.msra.mxu0 0
        %2132 = vmatprep.subr.bf16.mxu0 0
        %2133 = vmatpush1.bf16.msra.mxu0 0
        %2134 = vmatprep.subr.bf16.mxu0 0
        %2135 = vmatpush1.bf16.msra.mxu0 0
        %2136 = vmatprep.subr.bf16.mxu0 0
        %2137 = vmatpush1.bf16.msra.mxu0 0
        %2138 = vmatprep.subr.bf16.mxu0 0
        %2139 = vmatpush1.bf16.msra.mxu0 0
        %2140 = vmatprep.subr.bf16.mxu0 0
        %2141 = vmatpush1.bf16.msra.mxu0 %v2124
        %2142 = vmatprep.subr.bf16.mxu0 0
        %2143 = vmatpush2.bf16.msra.mxu0 0
        %2144 = vmatprep.subr.bf16.mxu0 0
        %2145 = vmatpush2.bf16.msra.mxu0 0
        %2146 = vmatprep.subr.bf16.mxu0 0
        %2147 = vmatpush2.bf16.msra.mxu0 0
        %2148 = vmatprep.subr.bf16.mxu0 0
        %2149 = vmatpush2.bf16.msra.mxu0 0
        %2150 = vmatprep.subr.bf16.mxu0 0
        %2151 = vmatpush2.bf16.msra.mxu0 0
        %2152 = vmatprep.subr.bf16.mxu0 0
        %2153 = vmatpush2.bf16.msra.mxu0 0
        %2154 = vmatprep.subr.bf16.mxu0 0
        %2155 = vmatpush2.bf16.msra.mxu0 0
        %2156 = vmatprep.subr.bf16.mxu0 0
        %2157 = vmatpush2.bf16.msra.mxu0 0
        %2158 = vmatprep.mubr.bf16.mxu0 0
        %2159 = vmatmul.mubr.bf16.gmra.mxu0 %v2121
        %v2160 = vpop.f32.mrf.mxu0
        %v2161 = vadd.f32 0.0, %v2160
        %v2162 = vpop.f32.mrf.mxu0
        %v2163 = vpop.f32.mrf.mxu0
        %v2164 = vpop.f32.mrf.mxu0
        %2165 = vdwg.mxu0
        %v2167 = vsel %vm1837, %v2071, 0
        %v2170 = vsel %vm2076, %v1835, 0
        %2172 = vmatprep.subr.bf16.mxu0 0
        %2173 = vmatpush1.bf16.msra.mxu0 0
        %2174 = vmatprep.subr.bf16.mxu0 0
        %2175 = vmatpush1.bf16.msra.mxu0 0
        %2176 = vmatprep.subr.bf16.mxu0 0
        %2177 = vmatpush1.bf16.msra.mxu0 0
        %2178 = vmatprep.subr.bf16.mxu0 0
        %2179 = vmatpush1.bf16.msra.mxu0 0
        %2180 = vmatprep.subr.bf16.mxu0 0
        %2181 = vmatpush1.bf16.msra.mxu0 0
        %2182 = vmatprep.subr.bf16.mxu0 0
        %2183 = vmatpush1.bf16.msra.mxu0 0
        %2184 = vmatprep.subr.bf16.mxu0 0
        %2185 = vmatpush1.bf16.msra.mxu0 0
        %2186 = vmatprep.subr.bf16.mxu0 0
        %2187 = vmatpush1.bf16.msra.mxu0 %v2170
        %2188 = vmatprep.subr.bf16.mxu0 0
        %2189 = vmatpush2.bf16.msra.mxu0 0
        %2190 = vmatprep.subr.bf16.mxu0 0
        %2191 = vmatpush2.bf16.msra.mxu0 0
        %2192 = vmatprep.subr.bf16.mxu0 0
        %2193 = vmatpush2.bf16.msra.mxu0 0
        %2194 = vmatprep.subr.bf16.mxu0 0
        %2195 = vmatpush2.bf16.msra.mxu0 0
        %2196 = vmatprep.subr.bf16.mxu0 0
        %2197 = vmatpush2.bf16.msra.mxu0 0
        %2198 = vmatprep.subr.bf16.mxu0 0
        %2199 = vmatpush2.bf16.msra.mxu0 0
        %2200 = vmatprep.subr.bf16.mxu0 0
        %2201 = vmatpush2.bf16.msra.mxu0 0
        %2202 = vmatprep.subr.bf16.mxu0 0
        %2203 = vmatpush2.bf16.msra.mxu0 0
        %2204 = vmatprep.mubr.bf16.mxu0 0
        %2205 = vmatmul.mubr.bf16.gmra.mxu0 %v2167
        %v2206 = vpop.f32.mrf.mxu0
        %v2207 = vadd.f32 0.0, %v2206
        %v2208 = vpop.f32.mrf.mxu0
        %v2209 = vpop.f32.mrf.mxu0
        %v2210 = vpop.f32.mrf.mxu0
        %2211 = vdwg.mxu0
        %v2213 = vsel %vm1837, %v2072, 0
        %v2216 = vsel %vm2076, %v1836, 0
        %2218 = vmatprep.subr.bf16.mxu0 0
        %2219 = vmatpush1.bf16.msra.mxu0 0
        %2220 = vmatprep.subr.bf16.mxu0 0
        %2221 = vmatpush1.bf16.msra.mxu0 0
        %2222 = vmatprep.subr.bf16.mxu0 0
        %2223 = vmatpush1.bf16.msra.mxu0 0
        %2224 = vmatprep.subr.bf16.mxu0 0
        %2225 = vmatpush1.bf16.msra.mxu0 0
        %2226 = vmatprep.subr.bf16.mxu0 0
        %2227 = vmatpush1.bf16.msra.mxu0 0
        %2228 = vmatprep.subr.bf16.mxu0 0
        %2229 = vmatpush1.bf16.msra.mxu0 0
        %2230 = vmatprep.subr.bf16.mxu0 0
        %2231 = vmatpush1.bf16.msra.mxu0 0
        %2232 = vmatprep.subr.bf16.mxu0 0
        %2233 = vmatpush1.bf16.msra.mxu0 %v2216
        %2234 = vmatprep.subr.bf16.mxu0 0
        %2235 = vmatpush2.bf16.msra.mxu0 0
        %2236 = vmatprep.subr.bf16.mxu0 0
        %2237 = vmatpush2.bf16.msra.mxu0 0
        %2238 = vmatprep.subr.bf16.mxu0 0
        %2239 = vmatpush2.bf16.msra.mxu0 0
        %2240 = vmatprep.subr.bf16.mxu0 0
        %2241 = vmatpush2.bf16.msra.mxu0 0
        %2242 = vmatprep.subr.bf16.mxu0 0
        %2243 = vmatpush2.bf16.msra.mxu0 0
        %2244 = vmatprep.subr.bf16.mxu0 0
        %2245 = vmatpush2.bf16.msra.mxu0 0
        %2246 = vmatprep.subr.bf16.mxu0 0
        %2247 = vmatpush2.bf16.msra.mxu0 0
        %2248 = vmatprep.subr.bf16.mxu0 0
        %2249 = vmatpush2.bf16.msra.mxu0 0
        %2250 = vmatprep.mubr.bf16.mxu0 0
        %2251 = vmatmul.mubr.bf16.gmra.mxu0 %v2213
        %v2252 = vpop.f32.mrf.mxu0
        %v2253 = vadd.f32 0.0, %v2252
        %v2254 = vpop.f32.mrf.mxu0
        %v2255 = vpop.f32.mrf.mxu0
        %v2256 = vpop.f32.mrf.mxu0
        %2257 = vdwg.mxu0
        %v2258 = vrcp.pop %v2059
        %v2259 = vrcp.pop %v2062
        %v2260 = vrcp.pop %v2065
        %v2261 = vrcp.pop %v2068
        %v2262 = vmul.f32 %v2115, %v2258
        %v2263 = vmul.f32 %v2161, %v2259
        %v2264 = vmul.f32 %v2207, %v2260
        %v2265 = vmul.f32 %v2253, %v2261
        %v2266 = vcombine.low %v2262, %v2264
        %v2267 = vcombine.high %v2262, %v2264
        %v2269 = vunpack.c.l.s4 1983009808
        %v2270 = vunpack.c.0.s8 %v2269
        %v2271 = vlaneseq
        %v2272 = vshrl.u32 %v2271, 7
        %v2273 = vsub.s32 %v2270, %v2272
        %v2274 = vrot.slane %v2266, %v2273
        %v2276 = vunpack.c.l.s4 1983009808
        %v2277 = vunpack.c.0.s8 %v2276
        %v2278 = vlaneseq
        %v2279 = vshrl.u32 %v2278, 7
        %v2280 = vsub.s32 %v2277, %v2279
        %v2281 = vrot.slane %v2267, %v2280
        %v2282 = vcombine.low %v2263, %v2265
        %v2283 = vcombine.high %v2263, %v2265
        %v2285 = vunpack.c.l.s4 1983009808
        %v2286 = vunpack.c.0.s8 %v2285
        %v2287 = vlaneseq
        %v2288 = vshrl.u32 %v2287, 7
        %v2289 = vsub.s32 %v2286, %v2288
        %v2290 = vrot.slane %v2282, %v2289
        %v2292 = vunpack.c.l.s4 1983009808
        %v2293 = vunpack.c.0.s8 %v2292
        %v2294 = vlaneseq
        %v2295 = vshrl.u32 %v2294, 7
        %v2296 = vsub.s32 %v2293, %v2295
        %v2297 = vrot.slane %v2283, %v2296
        %v2298 = vcombine.low %v2274, %v2290
        %v2299 = vcombine.high %v2274, %v2290
        %v2301 = vunpack.c.l.s4 1934713408
        %v2302 = vunpack.c.0.s8 %v2301
        %v2303 = vlaneseq
        %v2304 = vshrl.u32 %v2303, 7
        %v2305 = vsub.s32 %v2302, %v2304
        %v2306 = vrot.slane %v2298, %v2305
        %v2308 = vunpack.c.l.s4 1934713408
        %v2309 = vunpack.c.0.s8 %v2308
        %v2310 = vlaneseq
        %v2311 = vshrl.u32 %v2310, 7
        %v2312 = vsub.s32 %v2309, %v2311
        %v2313 = vrot.slane %v2299, %v2312
        %v2314 = vcombine.low %v2281, %v2297
        %v2315 = vcombine.high %v2281, %v2297
        %v2317 = vunpack.c.l.s4 1934713408
        %v2318 = vunpack.c.0.s8 %v2317
        %v2319 = vlaneseq
        %v2320 = vshrl.u32 %v2319, 7
        %v2321 = vsub.s32 %v2318, %v2320
        %v2322 = vrot.slane %v2314, %v2321
        %v2324 = vunpack.c.l.s4 1934713408
        %v2325 = vunpack.c.0.s8 %v2324
        %v2326 = vlaneseq
        %v2327 = vshrl.u32 %v2326, 7
        %v2328 = vsub.s32 %v2325, %v2327
        %v2329 = vrot.slane %v2315, %v2328
        %v2330 = vcombine.high %v2306, 0.0
        %v2331 = vcombine.high %v2313, 0.0
        %v2332 = vcombine.high %v2322, 0.0
        %v2333 = vcombine.high %v2329, 0.0
        %v2334 = vcombine.low %v2306, %v2313
        %v2336 = vunpack.c.l.s4 1983009808
        %v2337 = vunpack.c.0.s8 %v2336
        %v2338 = vlaneseq
        %v2339 = vshrl.u32 %v2338, 7
        %v2340 = vsub.s32 %v2337, %v2339
        %v2341 = vrot.slane %v2334, %v2340
        %v2342 = vcombine.low %v2330, %v2331
        %v2344 = vunpack.c.l.s4 1983009808
        %v2345 = vunpack.c.0.s8 %v2344
        %v2346 = vlaneseq
        %v2347 = vshrl.u32 %v2346, 7
        %v2348 = vsub.s32 %v2345, %v2347
        %v2349 = vrot.slane %v2342, %v2348
        %v2350 = vcombine.low %v2322, %v2329
        %v2352 = vunpack.c.l.s4 1983009808
        %v2353 = vunpack.c.0.s8 %v2352
        %v2354 = vlaneseq
        %v2355 = vshrl.u32 %v2354, 7
        %v2356 = vsub.s32 %v2353, %v2355
        %v2357 = vrot.slane %v2350, %v2356
        %v2358 = vcombine.low %v2332, %v2333
        %v2360 = vunpack.c.l.s4 1983009808
        %v2361 = vunpack.c.0.s8 %v2360
        %v2362 = vlaneseq
        %v2363 = vshrl.u32 %v2362, 7
        %v2364 = vsub.s32 %v2361, %v2363
        %v2365 = vrot.slane %v2358, %v2364
        %v2366 = vcombine.low %v2341, %v2349
        %v2367 = vcombine.high %v2341, %v2349
        %v2369 = vunpack.c.l.s4 1934713408
        %v2370 = vunpack.c.0.s8 %v2369
        %v2371 = vlaneseq
        %v2372 = vshrl.u32 %v2371, 7
        %v2373 = vsub.s32 %v2370, %v2372
        %v2374 = vrot.slane %v2366, %v2373
        %v2376 = vunpack.c.l.s4 1934713408
        %v2377 = vunpack.c.0.s8 %v2376
        %v2378 = vlaneseq
        %v2379 = vshrl.u32 %v2378, 7
        %v2380 = vsub.s32 %v2377, %v2379
        %v2381 = vrot.slane %v2367, %v2380
        %v2382 = vcombine.low %v2357, %v2365
        %v2383 = vcombine.high %v2357, %v2365
        %v2385 = vunpack.c.l.s4 1934713408
        %v2386 = vunpack.c.0.s8 %v2385
        %v2387 = vlaneseq
        %v2388 = vshrl.u32 %v2387, 7
        %v2389 = vsub.s32 %v2386, %v2388
        %v2390 = vrot.slane %v2382, %v2389
        %v2392 = vunpack.c.l.s4 1934713408
        %v2393 = vunpack.c.0.s8 %v2392
        %v2394 = vlaneseq
        %v2395 = vshrl.u32 %v2394, 7
        %v2396 = vsub.s32 %v2393, %v2395
        %v2397 = vrot.slane %v2383, %v2396
        %v2398 = vcombine.low %v2374, %v2390
        %v2399 = vcombine.high %v2374, %v2390
        %v2400 = vcombine.low %v2381, %v2397
        %v2401 = vcombine.high %v2381, %v2397
        %2403 = vrot.lane.b32.xlu0 %v2399, 8
        %v2404 = vpop.permute.xlu0 %2403
        %2407 = vrot.lane.b32.xlu0 %v2400, 16
        %v2408 = vpop.permute.xlu0 %2407
        %2411 = vrot.lane.b32.xlu0 %v2401, 24
        %v2412 = vpop.permute.xlu0 %2411
        %v2414 = vsel %vm1837, %v2398, %v2404
        %vm2415 = vcmask 130048
        %v2416 = vsel %vm2415, %v2414, %v2408
        %vm2417 = vcmask 195584
        %v2418 = vsel %vm2417, %v2416, %v2412
        %v2419 = vpack.c.bf16 %v2418, %v2418
        %v2420 = vld [vmem:[%s5] sm:$0xf]
        %v2421 = vld [vmem:[%s5 + $0x4] sm:$0xf]
        %v2422 = vld [vmem:[%s5 + $0x8] sm:$0xf]
        %v2423 = vld [vmem:[%s5 + $0xc] sm:$0xf]
        %v2424 = vld [vmem:[#allocation8] sm:$0x1]
        %v2426 = vlaneseq
        %v2427 = vshrl.u32 %v2426, 7
        %v2428 = vsub.s32 0, %v2427
        %v2429 = vrot.slane %v2424, %v2428
        %v2435 = vunpack.c.l.b16 %v2420
        %v2436 = vunpack.c.l.b16 %v2421
        %v2437 = vunpack.c.l.b16 %v2422
        %v2438 = vunpack.c.l.b16 %v2423
        %v2439 = vpack.c.b16 %v2436, %v2435
        %v2440 = vpack.c.b16 %v2438, %v2437
        %v2444 = vsel %vm542, %v2419, 0
        %2446 = vmatprep.subr.bf16.mxu0 0
        %2447 = vmatpush1.bf16.msra.mxu0 0
        %2448 = vmatprep.subr.bf16.mxu0 0
        %2449 = vmatpush1.bf16.msra.mxu0 0
        %2450 = vmatprep.subr.bf16.mxu0 0
        %2451 = vmatpush1.bf16.msra.mxu0 0
        %2452 = vmatprep.subr.bf16.mxu0 0
        %2453 = vmatpush1.bf16.msra.mxu0 0
        %2454 = vmatprep.subr.bf16.mxu0 0
        %2455 = vmatpush1.bf16.msra.mxu0 0
        %2456 = vmatprep.subr.bf16.mxu0 0
        %2457 = vmatpush1.bf16.msra.mxu0 0
        %2458 = vmatprep.subr.bf16.mxu0 0
        %2459 = vmatpush1.bf16.msra.mxu0 %v2440
        %2460 = vmatprep.subr.bf16.mxu0 0
        %2461 = vmatpush1.bf16.msra.mxu0 %v2439
        %2462 = vmatprep.subr.bf16.mxu0 0
        %2463 = vmatpush2.bf16.msra.mxu0 0
        %2464 = vmatprep.subr.bf16.mxu0 0
        %2465 = vmatpush2.bf16.msra.mxu0 0
        %2466 = vmatprep.subr.bf16.mxu0 0
        %2467 = vmatpush2.bf16.msra.mxu0 0
        %2468 = vmatprep.subr.bf16.mxu0 0
        %2469 = vmatpush2.bf16.msra.mxu0 0
        %2470 = vmatprep.subr.bf16.mxu0 0
        %2471 = vmatpush2.bf16.msra.mxu0 0
        %2472 = vmatprep.subr.bf16.mxu0 0
        %2473 = vmatpush2.bf16.msra.mxu0 0
        %2474 = vmatprep.subr.bf16.mxu0 0
        %2475 = vmatpush2.bf16.msra.mxu0 0
        %2476 = vmatprep.subr.bf16.mxu0 0
        %2477 = vmatpush2.bf16.msra.mxu0 0
        %2478 = vmatprep.mubr.bf16.mxu0 0
        %2479 = vmatmul.mubr.bf16.gmra.mxu0 %v2444
        %v2480 = vpop.f32.mrf.mxu0
        %v2481 = vadd.f32 %v2429, %v2480
        %v2482 = vpop.f32.mrf.mxu0
        %v2483 = vpop.f32.mrf.mxu0
        %v2484 = vpop.f32.mrf.mxu0
        %2485 = vdwg.mxu0
        %v2486 = vadd.f32 %v540, %v2481
        %v2487 = vmul.f32 %v2486, %v2486
        %v2488 = vsel %vm542, %v2487, 0.0
        %2489 = vadd.xlane.f32.xlu0 %v2488
        %v2490 = vpop.xlane.xlu0 %2489
        %v2491 = vmul.f32 %v2490, %v546
        %v2492 = vadd.f32 %v2491, 1e-06
        %v2493 = vrsqrt.pop %v2492
        %v2494 = vld [vmem:[#allocation5] sm:$0x1]
        %v2496 = vlaneseq
        %v2497 = vshrl.u32 %v2496, 7
        %v2498 = vsub.s32 0, %v2497
        %v2499 = vrot.slane %v2494, %v2498
        %v2501 = vmul.f32 %v2499, %v2486
        %v2502 = vmul.f32 %v2501, %v2493
        %v2503 = vpack.c.bf16 %v2502, %v2502
        %v2504 = vld [vmem:[#allocation10] sm:$0xf]
        %v2505 = vld [vmem:[#allocation10 + $0x4] sm:$0xf]
        %v2506 = vld [vmem:[#allocation10 + $0x8] sm:$0xf]
        %v2507 = vld [vmem:[#allocation10 + $0xc] sm:$0xf]
        %v2508 = vld [vmem:[#allocation11] sm:$0x1]
        %v2510 = vlaneseq
        %v2511 = vshrl.u32 %v2510, 7
        %v2512 = vsub.s32 0, %v2511
        %v2513 = vrot.slane %v2508, %v2512
        %v2519 = vunpack.c.l.b16 %v2504
        %v2520 = vunpack.c.l.b16 %v2505
        %v2521 = vunpack.c.l.b16 %v2506
        %v2522 = vunpack.c.l.b16 %v2507
        %v2523 = vpack.c.b16 %v2520, %v2519
        %v2524 = vpack.c.b16 %v2522, %v2521
        %v2528 = vsel %vm542, %v2503, 0
        %2530 = vmatprep.subr.bf16.mxu0 0
        %2531 = vmatpush1.bf16.msra.mxu0 0
        %2532 = vmatprep.subr.bf16.mxu0 0
        %2533 = vmatpush1.bf16.msra.mxu0 0
        %2534 = vmatprep.subr.bf16.mxu0 0
        %2535 = vmatpush1.bf16.msra.mxu0 0
        %2536 = vmatprep.subr.bf16.mxu0 0
        %2537 = vmatpush1.bf16.msra.mxu0 0
        %2538 = vmatprep.subr.bf16.mxu0 0
        %2539 = vmatpush1.bf16.msra.mxu0 0
        %2540 = vmatprep.subr.bf16.mxu0 0
        %2541 = vmatpush1.bf16.msra.mxu0 0
        %2542 = vmatprep.subr.bf16.mxu0 0
        %2543 = vmatpush1.bf16.msra.mxu0 %v2524
        %2544 = vmatprep.subr.bf16.mxu0 0
        %2545 = vmatpush1.bf16.msra.mxu0 %v2523
        %2546 = vmatprep.subr.bf16.mxu0 0
        %2547 = vmatpush2.bf16.msra.mxu0 0
        %2548 = vmatprep.subr.bf16.mxu0 0
        %2549 = vmatpush2.bf16.msra.mxu0 0
        %2550 = vmatprep.subr.bf16.mxu0 0
        %2551 = vmatpush2.bf16.msra.mxu0 0
        %2552 = vmatprep.subr.bf16.mxu0 0
        %2553 = vmatpush2.bf16.msra.mxu0 0
        %2554 = vmatprep.subr.bf16.mxu0 0
        %2555 = vmatpush2.bf16.msra.mxu0 0
        %2556 = vmatprep.subr.bf16.mxu0 0
        %2557 = vmatpush2.bf16.msra.mxu0 0
        %2558 = vmatprep.subr.bf16.mxu0 0
        %2559 = vmatpush2.bf16.msra.mxu0 0
        %2560 = vmatprep.subr.bf16.mxu0 0
        %2561 = vmatpush2.bf16.msra.mxu0 0
        %2562 = vmatprep.mubr.bf16.mxu0 0
        %2563 = vmatmul.mubr.bf16.gmra.mxu0 %v2528
        %v2564 = vpop.f32.mrf.mxu0
        %v2565 = vadd.f32 %v2513, %v2564
        %v2566 = vpop.f32.mrf.mxu0
        %v2567 = vpop.f32.mrf.mxu0
        %v2568 = vpop.f32.mrf.mxu0
        %2569 = vdwg.mxu0
        %v2570 = vxor.u32 %v2565, 2147483648
        %v2571 = vmul.f32 %v2570, 1.442695
        %v2572 = vpow.pop %v2571
        %v2573 = vadd.f32 %v2572, 1.0
        %v2574 = vrcp.pop %v2573
        %v2575 = vmul.f32 1.0, %v2574
        %2577 = vrot.lane.b32.xlu0 %v2575, 64
        %v2578 = vpop.permute.xlu0 %2577
        %v2580 = vmul.f32 %v2565, %v2578
        %v2581 = vpack.c.bf16 %v2580, %v2580
        %v2582 = vld [vmem:[%s9] sm:$0xf]
        %v2583 = vld [vmem:[%s9 + $0x4] sm:$0xf]
        %v2584 = vld [vmem:[%s9 + $0x8] sm:$0xf]
        %v2585 = vld [vmem:[%s9 + $0xc] sm:$0xf]
        %v2586 = vld [vmem:[%s9 + $0x10] sm:$0xf]
        %v2587 = vld [vmem:[%s9 + $0x14] sm:$0xf]
        %v2588 = vld [vmem:[%s9 + $0x18] sm:$0xf]
        %v2589 = vld [vmem:[%s9 + $0x1c] sm:$0xf]
        %v2590 = vld [vmem:[%s10] sm:$0x1]
        %v2592 = vlaneseq
        %v2593 = vshrl.u32 %v2592, 7
        %v2594 = vsub.s32 0, %v2593
        %v2595 = vrot.slane %v2590, %v2594
        %v2605 = vunpack.c.l.b16 %v2582
        %v2606 = vunpack.c.l.b16 %v2583
        %v2607 = vunpack.c.l.b16 %v2584
        %v2608 = vunpack.c.l.b16 %v2585
        %v2609 = vunpack.c.l.b16 %v2586
        %v2610 = vunpack.c.l.b16 %v2587
        %v2611 = vunpack.c.l.b16 %v2588
        %v2612 = vunpack.c.l.b16 %v2589
        %v2613 = vpack.c.b16 %v2606, %v2605
        %v2614 = vpack.c.b16 %v2608, %v2607
        %v2615 = vpack.c.b16 %v2610, %v2609
        %v2616 = vpack.c.b16 %v2612, %v2611
        %vm2621 = vcmask 523264
        %v2623 = vsel %vm2621, %v2581, 0
        %2625 = vmatprep.subr.bf16.mxu0 0
        %2626 = vmatpush1.bf16.msra.mxu0 0
        %2627 = vmatprep.subr.bf16.mxu0 0
        %2628 = vmatpush1.bf16.msra.mxu0 0
        %2629 = vmatprep.subr.bf16.mxu0 0
        %2630 = vmatpush1.bf16.msra.mxu0 0
        %2631 = vmatprep.subr.bf16.mxu0 0
        %2632 = vmatpush1.bf16.msra.mxu0 0
        %2633 = vmatprep.subr.bf16.mxu0 0
        %2634 = vmatpush1.bf16.msra.mxu0 %v2616
        %2635 = vmatprep.subr.bf16.mxu0 0
        %2636 = vmatpush1.bf16.msra.mxu0 %v2615
        %2637 = vmatprep.subr.bf16.mxu0 0
        %2638 = vmatpush1.bf16.msra.mxu0 %v2614
        %2639 = vmatprep.subr.bf16.mxu0 0
        %2640 = vmatpush1.bf16.msra.mxu0 %v2613
        %2641 = vmatprep.subr.bf16.mxu0 0
        %2642 = vmatpush2.bf16.msra.mxu0 0
        %2643 = vmatprep.subr.bf16.mxu0 0
        %2644 = vmatpush2.bf16.msra.mxu0 0
        %2645 = vmatprep.subr.bf16.mxu0 0
        %2646 = vmatpush2.bf16.msra.mxu0 0
        %2647 = vmatprep.subr.bf16.mxu0 0
        %2648 = vmatpush2.bf16.msra.mxu0 0
        %2649 = vmatprep.subr.bf16.mxu0 0
        %2650 = vmatpush2.bf16.msra.mxu0 0
        %2651 = vmatprep.subr.bf16.mxu0 0
        %2652 = vmatpush2.bf16.msra.mxu0 0
        %2653 = vmatprep.subr.bf16.mxu0 0
        %2654 = vmatpush2.bf16.msra.mxu0 0
        %2655 = vmatprep.subr.bf16.mxu0 0
        %2656 = vmatpush2.bf16.msra.mxu0 0
        %2657 = vmatprep.mubr.bf16.mxu0 0
        %2658 = vmatmul.mubr.bf16.gmra.mxu0 %v2623
        %v2659 = vpop.f32.mrf.mxu0
        %v2660 = vadd.f32 %v2595, %v2659
        %v2661 = vpop.f32.mrf.mxu0
        %v2662 = vpop.f32.mrf.mxu0
        %v2663 = vpop.f32.mrf.mxu0
        %2664 = vdwg.mxu0
        %v2665 = vadd.f32 %v2486, %v2660
        %2666 = vst.msk [vmem:[%s534] sm:$0xff] %vm542, %v2665
        %s2667 = sand.u32 %s318, 1
        %s2668 = scalar_lea.sflag [#allocation4], %s2667
        %s2669 = sand.u32 %s318, 1
        %s2670 = smul.addr %s2669, 8
        %s2671 = scalar_lea.vmem [#allocation16], %s2670
        // Predicated region
        $region105: #{tpu_custom_call.1} parent=71 // pred_check
          %p2672 = pneg %p328
        $region106: #{tpu_custom_call.1} parent=71 // pred_check_branch
          %2674 = sbr.rel (%p2672) target = $region108
        $region107: #{tpu_custom_call.1} parent=71 // pred_region
          %s2676 = ssub.s32 128, 128
          %2677 = vsyncadd %s2668, %s2676
          %s2678 = smul.addr %s32, 128
          %s2679 = scalar_lea.hbm %s13, %s2678
          %s2681 = sshll.u32 %s2671, 4
          %s2682 = int_to_ptr.vmem [resolvable:$true] %s2681
          %2684 = dma.vmem_to_hbm [thread:$0]  %s2682, 128, %s2679, %s2668
        $region108: #{tpu_custom_call.1} parent=71 // pred_fallthru
          _
      $region72: #{tpu_custom_call.1} parent=5 // pred_fallthru
        _
      %p2685 = scmp.le.s32.totalorder 2, %s27
      // Predicated region
      $region109: #{tpu_custom_call.1} parent=5 // pred_check
        %p2686 = pneg %p2685
      $region110: #{tpu_custom_call.1} parent=5 // pred_check_branch
        %2688 = sbr.rel (%p2686) target = $region112
      $region111: #{tpu_custom_call.1} parent=5 // pred_region
        %s2689 = ssub.s32 %s27, 2
        // Predicated region
        $region113: #{tpu_custom_call.1} parent=111 // pred_check
          %p2690 = pneg %p334
        $region114: #{tpu_custom_call.1} parent=111 // pred_check_branch
          %2692 = sbr.rel (%p2690) target = $region116
        $region115: #{tpu_custom_call.1} parent=111 // pred_region
          %s2693 = sand.u32 %s319, 1
          %s2694 = scalar_lea.sflag [#allocation4], %s2693
          %s2695 = sand.u32 %s319, 1
          %s2696 = smul.addr %s2695, 8
          %s2697 = scalar_lea.vmem [#allocation16], %s2696
          %2698 = dma.done %s2694, 128
        $region116: #{tpu_custom_call.1} parent=111 // pred_fallthru
          _
      $region112: #{tpu_custom_call.1} parent=5 // pred_fallthru
        _
    $region6: #{tpu_custom_call.1} parent=1 // loop_footer
      %s31 = sadd.s32 1, %s27
    $region7: #{tpu_custom_call.1} parent=1 // loop_footer_branch
      %26 = sbr.rel target = $region3
    $region8: #{tpu_custom_call.1} parent=1 // loop_exit
      _
    %2699 = vsyncpa [#allocation3], 1
    %s2700 = scalar_lea.sflag [#allocation3], 1
    %2701 = vsyncpa %s2700, 1
    %2702 = vsyncpa [#allocation6], 1
    %2703 = vsyncpa [#allocation9], 1
    %2704 = vsyncpa [#allocation12], 1
    %2705 = vsyncpa [#allocation15], 1
    %2706 = vsyncpa [#allocation4], 1
    %s2707 = scalar_lea.sflag [#allocation4], 1
    %2708 = vsyncpa %s2707, 1

</llo_original>
